<compile_context>
chip_gen: v5e
topology: v5e:2x2
jax: 0.10.0
libtpu: 0.0.40
codegen_flags: <defaults>
</compile_context>

<pallas_src>
import functools
import math

import jax
import jax.numpy as jnp
from jax.experimental import pallas as pl
from jax.experimental.pallas import tpu as pltpu


def _layernorm(x, g, b, eps=1e-5):
    # x: [M, D] (f32), g/b: [1, D] (f32)
    mu = jnp.mean(x, axis=-1, keepdims=True)
    var = jnp.mean((x - mu) ** 2, axis=-1, keepdims=True)
    return (x - mu) * jax.lax.rsqrt(var + eps) * g + b


def _encoder_kernel(x_ref,
                    ln1_g_ref, ln1_b_ref, w_qkv_ref, w_out_ref, b_out_ref,
                    ln2_g_ref, ln2_b_ref,
                    w_ff1a_ref, b_ff1a_ref, w_ff1g_ref, b_ff1g_ref,
                    w_ff2_ref, b_ff2_ref,
                    o_ref, act_ref, *, heads, dim_head, compute_dtype):
    """One (batch block, layer) grid step of the fused encoder stack."""
    layer = pl.program_id(1)
    depth = pl.num_programs(1)
    scale = dim_head ** (-0.5)
    inner = heads * dim_head
    cdt = compute_dtype

    # Load the input activation from HBM only once per batch block.
    @pl.when(layer == 0)
    def _():
        act_ref[...] = x_ref[...].astype(jnp.float32)

    x3 = act_ref[...]                                   # (Bt, N, D) f32, VMEM-resident
    bt, n_tok, d_model = x3.shape
    x = x3.reshape(bt * n_tok, d_model)                 # token-major, lane-dense

    # ---------------- Residual(PreNorm(Attention)) ----------------
    x_ln = _layernorm(x, ln1_g_ref[...], ln1_b_ref[...])

    # Single lane-dense QKV projection: [Bt*N, D] @ [D, 3*inner].
    qkv = jnp.dot(x_ln.astype(cdt), w_qkv_ref[...],
                  preferred_element_type=jnp.float32)   # (Bt*N, 3*inner) f32
    qkv = qkv.reshape(bt, n_tok, 3 * inner)

    head_outs = []
    for h in range(heads):                              # static loop (small H)
        sl_q = slice(h * dim_head, (h + 1) * dim_head)
        sl_k = slice(inner + h * dim_head, inner + (h + 1) * dim_head)
        sl_v = slice(2 * inner + h * dim_head, 2 * inner + (h + 1) * dim_head)
        qh = qkv[:, :, sl_q].astype(cdt)                # (Bt, N, dh)
        kh = qkv[:, :, sl_k].astype(cdt)
        vh = qkv[:, :, sl_v].astype(cdt)

        sim = jnp.einsum("bid,bjd->bij", qh, kh,
                         preferred_element_type=jnp.float32) * scale   # (Bt,N,N) f32
        sim = sim - jnp.max(sim, axis=-1, keepdims=True)
        p = jnp.exp(sim)
        denom = jnp.sum(p, axis=-1, keepdims=True)
        # EUP approximate reciprocal + one Newton step (~f32-exact, divide off VALU).
        r = pl.reciprocal(denom, approx=True)
        r = r * (2.0 - denom * r)
        attn = p * r
        head_outs.append(jnp.einsum("bij,bjd->bid", attn.astype(cdt), vh,
                                    preferred_element_type=jnp.float32))  # (Bt,N,dh)

    # Fused output projection: concat heads on the lane axis -> one K=inner matmul.
    out = jnp.concatenate(head_outs, axis=-1)           # (Bt, N, inner)
    out2d = out.reshape(bt * n_tok, inner)
    attn_out = jnp.dot(out2d.astype(cdt), w_out_ref[...],
                       preferred_element_type=jnp.float32) + b_out_ref[...]
    x1 = x + attn_out                                   # f32 residual stream

    # ---------------- Residual(PreNorm(GEGLU FeedForward)) ----------------
    x_ln2 = _layernorm(x1, ln2_g_ref[...], ln2_b_ref[...]).astype(cdt)
    a = jnp.dot(x_ln2, w_ff1a_ref[...],
                preferred_element_type=jnp.float32) + b_ff1a_ref[...]     # (Bt*N, hidden)
    g = jnp.dot(x_ln2, w_ff1g_ref[...],
                preferred_element_type=jnp.float32) + b_ff1g_ref[...]     # (Bt*N, hidden)
    # exact (erf) GELU == torch.nn.functional.gelu default
    gelu_g = 0.5 * g * (1.0 + jax.lax.erf(g * (1.0 / math.sqrt(2.0))))
    ff = jnp.dot((a * gelu_g).astype(cdt), w_ff2_ref[...],
                 preferred_element_type=jnp.float32) + b_ff2_ref[...]
    x2 = x1 + ff

    act_ref[...] = x2.reshape(bt, n_tok, d_model)       # stays in VMEM

    # Write to HBM only after the final layer.
    @pl.when(layer == depth - 1)
    def _():
        o_ref[...] = x2.reshape(bt, n_tok, d_model).astype(o_ref.dtype)


def transformer_encoder(x, layer_params, *, heads, dim_head,
                        compute_dtype=jnp.float32, batch_block=None):
    """Applies `depth` Blocks in a single fused pallas_call."""
    B, N, D = x.shape
    inner = heads * dim_head
    depth = len(layer_params)
    assert depth >= 1
    hidden = layer_params[0]["w_ff2"].shape[0]
    wdt = compute_dtype   # matmul operands / stored weights; stats stay f32

    # ---- pick the batch block Bt ----
    # Large enough to amortise weight streaming and fill MXU rows, small enough
    # to fit VMEM, and keeping >= 2 "parallel" blocks so both v7x TCs get work.
    if batch_block is None:
        candidates = [bt for bt in range(1, B + 1) if B % bt == 0]
        ok = [bt for bt in candidates if (B // bt) >= 2] or [B]
        ok = [bt for bt in ok if bt * N * D * 4 <= (4 << 20)] or [ok[0]]
        batch_block = max(ok)
    Bt = batch_block
    assert B % Bt == 0, "batch must be divisible by the batch block"

    def stack(name, dtype=jnp.float32):
        return jnp.stack([p[name] for p in layer_params], axis=0).astype(dtype)

    # Pre-split the GEGLU weight/bias so `a` and `gates` come from two
    # lane-dense matmuls (no unaligned lane split in-kernel).
    w_ff1 = stack("w_ff1", wdt)                              # [L, D, 2*hidden]
    b_ff1 = stack("b_ff1")                                   # [L, 1, 2*hidden]
    w_ff1_a, w_ff1_g = w_ff1[:, :, :hidden], w_ff1[:, :, hidden:]
    b_ff1_a, b_ff1_g = b_ff1[:, :, :hidden], b_ff1[:, :, hidden:]

    args = [
        x,
        stack("ln1_g"), stack("ln1_b"),
        stack("w_qkv", wdt), stack("w_out", wdt), stack("b_out"),
        stack("ln2_g"), stack("ln2_b"),
        w_ff1_a, b_ff1_a, w_ff1_g, b_ff1_g,
        stack("w_ff2", wdt), stack("b_ff2"),
    ]

    def wspec(shape):
        # Stacked per-layer parameter: depth axis squeezed out of the kernel
        # view, block index follows the trailing ("arbitrary") grid axis.
        nd = len(shape)
        return pl.BlockSpec((None,) + tuple(shape), lambda b, l: (l,) + (0,) * nd)

    in_specs = [
        pl.BlockSpec((Bt, N, D), lambda b, l: (b, 0, 0)),     # x (resident over depth)
        wspec((1, D)), wspec((1, D)),                         # ln1 gamma/beta
        wspec((D, 3 * inner)),                                # w_qkv (lane-dense)
        wspec((inner, D)), wspec((1, D)),                     # w_out / b_out
        wspec((1, D)), wspec((1, D)),                         # ln2 gamma/beta
        wspec((D, hidden)), wspec((1, hidden)),               # w_ff1 "a" half
        wspec((D, hidden)), wspec((1, hidden)),               # w_ff1 "gates" half
        wspec((hidden, D)), wspec((1, D)),                    # w_ff2 / b_ff2
    ]

    # ---- advisory cost estimate (weights stream once per batch BLOCK) ----
    num_batch_blocks = B // Bt
    weight_bytes = sum(int(a.size) * a.dtype.itemsize for a in args[1:])
    bytes_accessed = int(num_batch_blocks * weight_bytes
                         + 2 * int(x.size) * x.dtype.itemsize)
    flops = 2 * B * depth * N * (
        D * 3 * inner            # qkv projection
        + 2 * N * inner          # q@k^T and attn@v
        + inner * D              # output projection
        + D * 2 * hidden + hidden * D)   # feed-forward
    transcendentals = B * depth * (heads * N * N + N * hidden)

    # ---- explicit VMEM budget (double-buffered weights + activations) ----
    w_item = jnp.dtype(wdt).itemsize
    per_layer_w = ((D * 3 * inner + inner * D + 2 * D * hidden + hidden * D) * w_item
                   + (6 * D + 2 * hidden) * 4)
    act_bytes = Bt * N * D * 4
    live_interm = (Bt * N * (3 * inner + inner + 2 * hidden) * 4
                   + 2 * Bt * N * N * 4)                      # qkv/out/ffn + sim/p (per head)
    est = 2 * per_layer_w + 4 * act_bytes + live_interm
    vmem_limit = int(min(64 << 20, max(2 * est, 32 << 20)))

    kernel = functools.partial(_encoder_kernel, heads=heads, dim_head=dim_head,
                               compute_dtype=compute_dtype)

    return pl.pallas_call(
        kernel,
        out_shape=jax.ShapeDtypeStruct((B, N, D), x.dtype),
        grid_spec=pltpu.PrefetchScalarGridSpec(
            num_scalar_prefetch=0,
            # batch blocks parallel (outer), depth sequential (LAST axis — required
            # for the VMEM-resident activation carry).
            grid=(num_batch_blocks, depth),
            in_specs=in_specs,
            out_specs=pl.BlockSpec((Bt, N, D), lambda b, l: (b, 0, 0)),
            scratch_shapes=[pltpu.VMEM((Bt, N, D), jnp.float32)],
        ),
        compiler_params=pltpu.CompilerParams(
            dimension_semantics=("parallel", "arbitrary"),
            vmem_limit_bytes=vmem_limit),
        cost_estimate=pl.CostEstimate(flops=int(flops),
                                      transcendentals=int(transcendentals),
                                      bytes_accessed=bytes_accessed),
    )(*args)


# ---------------- pure-JAX reference for validation ----------------
def _ref_block(x, p, *, heads, dim_head):
    scale = dim_head ** (-0.5)
    inner = heads * dim_head

    def ln(z, g, b):
        mu = jnp.mean(z, -1, keepdims=True)
        var = jnp.mean((z - mu) ** 2, -1, keepdims=True)
        return (z - mu) / jnp.sqrt(var + 1e-5) * g + b

    xl = ln(x, p["ln1_g"], p["ln1_b"])
    qkv = xl @ p["w_qkv"]
    q, k, v = jnp.split(qkv, 3, axis=-1)
    B, N, _ = x.shape

    def heads_split(t):
        return t.reshape(B, N, heads, dim_head).transpose(0, 2, 1, 3)

    q, k, v = map(heads_split, (q, k, v))
    sim = jnp.einsum("bhid,bhjd->bhij", q, k) * scale
    attn = jax.nn.softmax(sim, axis=-1)
    out = jnp.einsum("bhij,bhjd->bhid", attn, v)
    out = out.transpose(0, 2, 1, 3).reshape(B, N, inner)
    x1 = x + out @ p["w_out"] + p["b_out"]

    xl2 = ln(x1, p["ln2_g"], p["ln2_b"])
    h = xl2 @ p["w_ff1"] + p["b_ff1"]
    a, g = jnp.split(h, 2, axis=-1)
    ff = (a * jax.nn.gelu(g, approximate=False)) @ p["w_ff2"] + p["b_ff2"]
    return x1 + ff


def _init_layer(key, dim, heads, dim_head, mult=4):
    inner = heads * dim_head
    hidden = dim * mult
    ks = jax.random.split(key, 6)

    def u(k, shape, fan_in):
        bound = 1.0 / math.sqrt(fan_in)
        return jax.random.uniform(k, shape, jnp.float32, -bound, bound)

    return {
        "ln1_g": jnp.ones((1, dim), jnp.float32),
        "ln1_b": jnp.zeros((1, dim), jnp.float32),
        "w_qkv": u(ks[0], (dim, 3 * inner), dim),
        "w_out": u(ks[1], (inner, dim), inner),
        "b_out": u(ks[2], (1, dim), inner),
        "ln2_g": jnp.ones((1, dim), jnp.float32),
        "ln2_b": jnp.zeros((1, dim), jnp.float32),
        "w_ff1": u(ks[3], (dim, 2 * hidden), dim),
        "b_ff1": u(ks[4], (1, 2 * hidden), dim),
        "w_ff2": u(ks[5], (hidden, dim), hidden),
        "b_ff2": jnp.zeros((1, dim), jnp.float32),
    }


if __name__ == "__main__":
    # Small config consistent with the module: dim=32, depth=2, heads=2, dim_head=16
    B, N, dim = 4, 8, 32
    depth, heads, dim_head = 2, 2, 16

    key = jax.random.PRNGKey(0)
    kx, *kl = jax.random.split(key, depth + 1)
    x = jax.random.normal(kx, (B, N, dim), jnp.float32)
    layer_params = [_init_layer(k, dim, heads, dim_head) for k in kl]

    # Pure-JAX reference (dropout=0 at inference, so omitted in both paths).
    ref = x
    for p in layer_params:
        ref = _ref_block(ref, p, heads=heads, dim_head=dim_head)

    # f32-parity path.
    out = transformer_encoder(x, layer_params, heads=heads, dim_head=dim_head,
                              compute_dtype=jnp.float32)
    out = jax.block_until_ready(out)
    assert out.shape == (B, N, dim)
    assert jnp.allclose(out, ref, atol=1e-4, rtol=1e-4), "f32 mismatch vs JAX reference"

    # bf16-at-the-dot-boundary path (MXU-rate / HBM-traffic optimisation).
    out_bf16 = transformer_encoder(x, layer_params, heads=heads, dim_head=dim_head,
                                   compute_dtype=jnp.bfloat16)
    out_bf16 = jax.block_until_ready(out_bf16)
    assert jnp.allclose(out_bf16, ref, atol=1.5e-1, rtol=1e-1), "bf16 mismatch vs reference"

    print("KERNEL_OK")
</pallas_src>

<mosaic_0001>
module attributes {stable_mosaic.version = 11 : i64} {
  func.func @_encoder_kernel(%arg0: i32, %arg1: i32, %arg2: memref<2x8x32xf32, #tpu.memory_space<vmem>>, %arg3: memref<1x1x32xf32, #tpu.memory_space<vmem>>, %arg4: memref<1x1x32xf32, #tpu.memory_space<vmem>>, %arg5: memref<1x32x96xf32, #tpu.memory_space<vmem>>, %arg6: memref<1x32x32xf32, #tpu.memory_space<vmem>>, %arg7: memref<1x1x32xf32, #tpu.memory_space<vmem>>, %arg8: memref<1x1x32xf32, #tpu.memory_space<vmem>>, %arg9: memref<1x1x32xf32, #tpu.memory_space<vmem>>, %arg10: memref<1x32x128xf32, #tpu.memory_space<vmem>>, %arg11: memref<1x1x128xf32, #tpu.memory_space<vmem>>, %arg12: memref<1x32x128xf32, #tpu.memory_space<vmem>>, %arg13: memref<1x1x128xf32, #tpu.memory_space<vmem>>, %arg14: memref<1x128x32xf32, #tpu.memory_space<vmem>>, %arg15: memref<1x1x32xf32, #tpu.memory_space<vmem>>, %arg16: memref<2x8x32xf32, #tpu.memory_space<vmem>>, %arg17: memref<2x8x32xf32, #tpu.memory_space<vmem>>) attributes {dimension_semantics = [#tpu.dimension_semantics<parallel>, #tpu.dimension_semantics<arbitrary>], iteration_bounds = array<i64: 2, 2>, scalar_prefetch = 0 : i64, scratch_operands = 1 : i64, tpu.core_type = #tpu.core_type<tc>, window_params = [{transform_indices = @transform_0, window_bounds = array<i64: 2, 8, 32>}, {transform_indices = @transform_1, window_bounds = array<i64: 1, 1, 32>}, {transform_indices = @transform_2, window_bounds = array<i64: 1, 1, 32>}, {transform_indices = @transform_3, window_bounds = array<i64: 1, 32, 96>}, {transform_indices = @transform_4, window_bounds = array<i64: 1, 32, 32>}, {transform_indices = @transform_5, window_bounds = array<i64: 1, 1, 32>}, {transform_indices = @transform_6, window_bounds = array<i64: 1, 1, 32>}, {transform_indices = @transform_7, window_bounds = array<i64: 1, 1, 32>}, {transform_indices = @transform_8, window_bounds = array<i64: 1, 32, 128>}, {transform_indices = @transform_9, window_bounds = array<i64: 1, 1, 128>}, {transform_indices = @transform_10, window_bounds = array<i64: 1, 32, 128>}, {transform_indices = @transform_11, window_bounds = array<i64: 1, 1, 128>}, {transform_indices = @transform_12, window_bounds = array<i64: 1, 128, 32>}, {transform_indices = @transform_13, window_bounds = array<i64: 1, 1, 32>}, {transform_indices = @transform_14, window_bounds = array<i64: 2, 8, 32>}]} {
    %c0_i32 = arith.constant 0 : i32
    %0 = arith.cmpi eq, %arg1, %c0_i32 : i32
    %1 = arith.extui %0 : i1 to i32
    %c0_i32_0 = arith.constant 0 : i32
    %2 = arith.cmpi ne, %1, %c0_i32_0 : i32
    scf.if %2 {
      %c0_75 = arith.constant 0 : index
      %c0_76 = arith.constant 0 : index
      %c0_77 = arith.constant 0 : index
      %149 = vector.load %arg2[%c0_75, %c0_76, %c0_77] : memref<2x8x32xf32, #tpu.memory_space<vmem>>, vector<2x8x32xf32>
      %c0_78 = arith.constant 0 : index
      %c0_79 = arith.constant 0 : index
      %c0_80 = arith.constant 0 : index
      %150 = vector.load %arg17[%c0_78, %c0_79, %c0_80] : memref<2x8x32xf32, #tpu.memory_space<vmem>>, vector<2x8x32xf32>
      tpu.vector_store %arg17[%c0_78, %c0_79, %c0_80], %149 {strides = array<i32>} : memref<2x8x32xf32, #tpu.memory_space<vmem>>, vector<2x8x32xf32>,
    } else {
    }
    %c0 = arith.constant 0 : index
    %c0_1 = arith.constant 0 : index
    %c0_2 = arith.constant 0 : index
    %3 = vector.load %arg17[%c0, %c0_1, %c0_2] : memref<2x8x32xf32, #tpu.memory_space<vmem>>, vector<2x8x32xf32>
    %4 = vector.shape_cast %3 : vector<2x8x32xf32> to vector<16x32xf32>
    %c0_3 = arith.constant 0 : index
    %c0_4 = arith.constant 0 : index
    %c0_5 = arith.constant 0 : index
    %5 = vector.load %arg3[%c0_3, %c0_4, %c0_5] : memref<1x1x32xf32, #tpu.memory_space<vmem>>, vector<1x1x32xf32>
    %6 = vector.shape_cast %5 : vector<1x1x32xf32> to vector<1x32xf32>
    %c0_6 = arith.constant 0 : index
    %c0_7 = arith.constant 0 : index
    %c0_8 = arith.constant 0 : index
    %7 = vector.load %arg4[%c0_6, %c0_7, %c0_8] : memref<1x1x32xf32, #tpu.memory_space<vmem>>, vector<1x1x32xf32>
    %8 = vector.shape_cast %7 : vector<1x1x32xf32> to vector<1x32xf32>
    %cst = arith.constant dense<0.000000e+00> : vector<16xf32>
    %9 = vector.multi_reduction <add>, %4, %cst [1] : vector<16x32xf32> to vector<16xf32>
    %10 = vector.shape_cast %9 : vector<16xf32> to vector<16x1xf32>
    %cst_9 = arith.constant 3.200000e+01 : f32
    %11 = vector.broadcast %cst_9 : f32 to vector<16x1xf32>
    %12 = arith.divf %10, %11 : vector<16x1xf32>
    %13 = vector.broadcast %12 : vector<16x1xf32> to vector<16x32xf32>
    %14 = arith.subf %4, %13 : vector<16x32xf32>
    %15 = arith.mulf %14, %14 : vector<16x32xf32>
    %cst_10 = arith.constant dense<0.000000e+00> : vector<16xf32>
    %16 = vector.multi_reduction <add>, %15, %cst_10 [1] : vector<16x32xf32> to vector<16xf32>
    %17 = vector.shape_cast %16 : vector<16xf32> to vector<16x1xf32>
    %cst_11 = arith.constant 3.200000e+01 : f32
    %18 = vector.broadcast %cst_11 : f32 to vector<16x1xf32>
    %19 = arith.divf %17, %18 : vector<16x1xf32>
    %20 = vector.broadcast %12 : vector<16x1xf32> to vector<16x32xf32>
    %21 = arith.subf %4, %20 : vector<16x32xf32>
    %cst_12 = arith.constant 9.99999974E-6 : f32
    %22 = vector.broadcast %cst_12 : f32 to vector<16x1xf32>
    %23 = arith.addf %19, %22 : vector<16x1xf32>
    %24 = math.rsqrt %23 : vector<16x1xf32>
    %25 = vector.broadcast %24 : vector<16x1xf32> to vector<16x32xf32>
    %26 = arith.mulf %21, %25 : vector<16x32xf32>
    %27 = vector.broadcast %6 : vector<1x32xf32> to vector<16x32xf32>
    %28 = arith.mulf %26, %27 : vector<16x32xf32>
    %29 = vector.broadcast %8 : vector<1x32xf32> to vector<16x32xf32>
    %30 = arith.addf %28, %29 : vector<16x32xf32>
    %c0_13 = arith.constant 0 : index
    %c0_14 = arith.constant 0 : index
    %c0_15 = arith.constant 0 : index
    %31 = vector.load %arg5[%c0_13, %c0_14, %c0_15] : memref<1x32x96xf32, #tpu.memory_space<vmem>>, vector<1x32x96xf32>
    %32 = vector.shape_cast %31 : vector<1x32x96xf32> to vector<32x96xf32>
    %cst_16 = arith.constant dense<0.000000e+00> : vector<16x96xf32>
    %33 = tpu.matmul %30, %32, %cst_16 {dimension_numbers = #tpu.dot_dimension_numbers<[1], [0], [0], [1], [0, 0, 1, 1], [], []>} : vector<16x32xf32>, vector<32x96xf32>, vector<16x96xf32> -> vector<16x96xf32>
    %34 = vector.shape_cast %33 : vector<16x96xf32> to vector<2x8x96xf32>
    %35 = vector.extract_strided_slice %34 {offsets = [0, 0, 0], sizes = [2, 8, 16], strides = [1, 1, 1]} : vector<2x8x96xf32> to vector<2x8x16xf32>
    %36 = vector.extract_strided_slice %34 {offsets = [0, 0, 32], sizes = [2, 8, 16], strides = [1, 1, 1]} : vector<2x8x96xf32> to vector<2x8x16xf32>
    %37 = vector.extract_strided_slice %34 {offsets = [0, 0, 64], sizes = [2, 8, 16], strides = [1, 1, 1]} : vector<2x8x96xf32> to vector<2x8x16xf32>
    "tpu.trace_start"() <{level = 10 : i32, message = "bid,bjd->bij"}> : () -> ()
    %cst_17 = arith.constant dense<0.000000e+00> : vector<2x8x8xf32>
    %38 = tpu.matmul %35, %36, %cst_17 {dimension_numbers = #tpu.dot_dimension_numbers<[2], [2], [1], [1], [0, 0, 0, 1, 1, 1], [0], [0]>} : vector<2x8x16xf32>, vector<2x8x16xf32>, vector<2x8x8xf32> -> vector<2x8x8xf32>
    "tpu.trace_stop"() : () -> ()
    %cst_18 = arith.constant 2.500000e-01 : f32
    %39 = vector.broadcast %cst_18 : f32 to vector<2x8x8xf32>
    %40 = arith.mulf %38, %39 : vector<2x8x8xf32>
    %cst_19 = arith.constant dense<0xFF800000> : vector<2x8xf32>
    %41 = vector.multi_reduction <maximumf>, %40, %cst_19 [2] : vector<2x8x8xf32> to vector<2x8xf32>
    %42 = vector.shape_cast %41 : vector<2x8xf32> to vector<2x8x1xf32>
    %43 = vector.broadcast %42 : vector<2x8x1xf32> to vector<2x8x8xf32>
    %44 = arith.subf %40, %43 : vector<2x8x8xf32>
    %45 = math.exp %44 : vector<2x8x8xf32>
    %cst_20 = arith.constant dense<0.000000e+00> : vector<2x8xf32>
    %46 = vector.multi_reduction <add>, %45, %cst_20 [2] : vector<2x8x8xf32> to vector<2x8xf32>
    %47 = vector.shape_cast %46 : vector<2x8xf32> to vector<2x8x1xf32>
    %48 = tpu.reciprocal %47 {approx = true} : vector<2x8x1xf32> -> vector<2x8x1xf32>
    %49 = arith.mulf %47, %48 : vector<2x8x1xf32>
    %cst_21 = arith.constant 2.000000e+00 : f32
    %50 = vector.broadcast %cst_21 : f32 to vector<2x8x1xf32>
    %51 = arith.subf %50, %49 : vector<2x8x1xf32>
    %52 = arith.mulf %48, %51 : vector<2x8x1xf32>
    %53 = vector.broadcast %52 : vector<2x8x1xf32> to vector<2x8x8xf32>
    %54 = arith.mulf %45, %53 : vector<2x8x8xf32>
    "tpu.trace_start"() <{level = 10 : i32, message = "bij,bjd->bid"}> : () -> ()
    %cst_22 = arith.constant dense<0.000000e+00> : vector<2x8x16xf32>
    %55 = tpu.matmul %54, %37, %cst_22 {dimension_numbers = #tpu.dot_dimension_numbers<[2], [1], [1], [2], [0, 0, 0, 1, 1, 2], [0], [0]>} : vector<2x8x8xf32>, vector<2x8x16xf32>, vector<2x8x16xf32> -> vector<2x8x16xf32>
    "tpu.trace_stop"() : () -> ()
    %56 = vector.extract_strided_slice %34 {offsets = [0, 0, 16], sizes = [2, 8, 16], strides = [1, 1, 1]} : vector<2x8x96xf32> to vector<2x8x16xf32>
    %57 = vector.extract_strided_slice %34 {offsets = [0, 0, 48], sizes = [2, 8, 16], strides = [1, 1, 1]} : vector<2x8x96xf32> to vector<2x8x16xf32>
    %58 = vector.extract_strided_slice %34 {offsets = [0, 0, 80], sizes = [2, 8, 16], strides = [1, 1, 1]} : vector<2x8x96xf32> to vector<2x8x16xf32>
    "tpu.trace_start"() <{level = 10 : i32, message = "bid,bjd->bij"}> : () -> ()
    %cst_23 = arith.constant dense<0.000000e+00> : vector<2x8x8xf32>
    %59 = tpu.matmul %56, %57, %cst_23 {dimension_numbers = #tpu.dot_dimension_numbers<[2], [2], [1], [1], [0, 0, 0, 1, 1, 1], [0], [0]>} : vector<2x8x16xf32>, vector<2x8x16xf32>, vector<2x8x8xf32> -> vector<2x8x8xf32>
    "tpu.trace_stop"() : () -> ()
    %cst_24 = arith.constant 2.500000e-01 : f32
    %60 = vector.broadcast %cst_24 : f32 to vector<2x8x8xf32>
    %61 = arith.mulf %59, %60 : vector<2x8x8xf32>
    %cst_25 = arith.constant dense<0xFF800000> : vector<2x8xf32>
    %62 = vector.multi_reduction <maximumf>, %61, %cst_25 [2] : vector<2x8x8xf32> to vector<2x8xf32>
    %63 = vector.shape_cast %62 : vector<2x8xf32> to vector<2x8x1xf32>
    %64 = vector.broadcast %63 : vector<2x8x1xf32> to vector<2x8x8xf32>
    %65 = arith.subf %61, %64 : vector<2x8x8xf32>
    %66 = math.exp %65 : vector<2x8x8xf32>
    %cst_26 = arith.constant dense<0.000000e+00> : vector<2x8xf32>
    %67 = vector.multi_reduction <add>, %66, %cst_26 [2] : vector<2x8x8xf32> to vector<2x8xf32>
    %68 = vector.shape_cast %67 : vector<2x8xf32> to vector<2x8x1xf32>
    %69 = tpu.reciprocal %68 {approx = true} : vector<2x8x1xf32> -> vector<2x8x1xf32>
    %70 = arith.mulf %68, %69 : vector<2x8x1xf32>
    %cst_27 = arith.constant 2.000000e+00 : f32
    %71 = vector.broadcast %cst_27 : f32 to vector<2x8x1xf32>
    %72 = arith.subf %71, %70 : vector<2x8x1xf32>
    %73 = arith.mulf %69, %72 : vector<2x8x1xf32>
    %74 = vector.broadcast %73 : vector<2x8x1xf32> to vector<2x8x8xf32>
    %75 = arith.mulf %66, %74 : vector<2x8x8xf32>
    "tpu.trace_start"() <{level = 10 : i32, message = "bij,bjd->bid"}> : () -> ()
    %cst_28 = arith.constant dense<0.000000e+00> : vector<2x8x16xf32>
    %76 = tpu.matmul %75, %58, %cst_28 {dimension_numbers = #tpu.dot_dimension_numbers<[2], [1], [1], [2], [0, 0, 0, 1, 1, 2], [0], [0]>} : vector<2x8x8xf32>, vector<2x8x16xf32>, vector<2x8x16xf32> -> vector<2x8x16xf32>
    "tpu.trace_stop"() : () -> ()
    %77 = tpu.concatenate %55, %76 in 2 : vector<2x8x16xf32>, vector<2x8x16xf32> -> vector<2x8x32xf32>
    %78 = vector.shape_cast %77 : vector<2x8x32xf32> to vector<16x32xf32>
    %c0_29 = arith.constant 0 : index
    %c0_30 = arith.constant 0 : index
    %c0_31 = arith.constant 0 : index
    %79 = vector.load %arg6[%c0_29, %c0_30, %c0_31] : memref<1x32x32xf32, #tpu.memory_space<vmem>>, vector<1x32x32xf32>
    %80 = vector.shape_cast %79 : vector<1x32x32xf32> to vector<32x32xf32>
    %cst_32 = arith.constant dense<0.000000e+00> : vector<16x32xf32>
    %81 = tpu.matmul %78, %80, %cst_32 {dimension_numbers = #tpu.dot_dimension_numbers<[1], [0], [0], [1], [0, 0, 1, 1], [], []>} : vector<16x32xf32>, vector<32x32xf32>, vector<16x32xf32> -> vector<16x32xf32>
    %c0_33 = arith.constant 0 : index
    %c0_34 = arith.constant 0 : index
    %c0_35 = arith.constant 0 : index
    %82 = vector.load %arg7[%c0_33, %c0_34, %c0_35] : memref<1x1x32xf32, #tpu.memory_space<vmem>>, vector<1x1x32xf32>
    %83 = vector.shape_cast %82 : vector<1x1x32xf32> to vector<1x32xf32>
    %84 = vector.broadcast %83 : vector<1x32xf32> to vector<16x32xf32>
    %85 = arith.addf %81, %84 : vector<16x32xf32>
    %86 = arith.addf %4, %85 : vector<16x32xf32>
    %c0_36 = arith.constant 0 : index
    %c0_37 = arith.constant 0 : index
    %c0_38 = arith.constant 0 : index
    %87 = vector.load %arg8[%c0_36, %c0_37, %c0_38] : memref<1x1x32xf32, #tpu.memory_space<vmem>>, vector<1x1x32xf32>
    %88 = vector.shape_cast %87 : vector<1x1x32xf32> to vector<1x32xf32>
    %c0_39 = arith.constant 0 : index
    %c0_40 = arith.constant 0 : index
    %c0_41 = arith.constant 0 : index
    %89 = vector.load %arg9[%c0_39, %c0_40, %c0_41] : memref<1x1x32xf32, #tpu.memory_space<vmem>>, vector<1x1x32xf32>
    %90 = vector.shape_cast %89 : vector<1x1x32xf32> to vector<1x32xf32>
    %cst_42 = arith.constant dense<0.000000e+00> : vector<16xf32>
    %91 = vector.multi_reduction <add>, %86, %cst_42 [1] : vector<16x32xf32> to vector<16xf32>
    %92 = vector.shape_cast %91 : vector<16xf32> to vector<16x1xf32>
    %cst_43 = arith.constant 3.200000e+01 : f32
    %93 = vector.broadcast %cst_43 : f32 to vector<16x1xf32>
    %94 = arith.divf %92, %93 : vector<16x1xf32>
    %95 = vector.broadcast %94 : vector<16x1xf32> to vector<16x32xf32>
    %96 = arith.subf %86, %95 : vector<16x32xf32>
    %97 = arith.mulf %96, %96 : vector<16x32xf32>
    %cst_44 = arith.constant dense<0.000000e+00> : vector<16xf32>
    %98 = vector.multi_reduction <add>, %97, %cst_44 [1] : vector<16x32xf32> to vector<16xf32>
    %99 = vector.shape_cast %98 : vector<16xf32> to vector<16x1xf32>
    %cst_45 = arith.constant 3.200000e+01 : f32
    %100 = vector.broadcast %cst_45 : f32 to vector<16x1xf32>
    %101 = arith.divf %99, %100 : vector<16x1xf32>
    %102 = vector.broadcast %94 : vector<16x1xf32> to vector<16x32xf32>
    %103 = arith.subf %86, %102 : vector<16x32xf32>
    %cst_46 = arith.constant 9.99999974E-6 : f32
    %104 = vector.broadcast %cst_46 : f32 to vector<16x1xf32>
    %105 = arith.addf %101, %104 : vector<16x1xf32>
    %106 = math.rsqrt %105 : vector<16x1xf32>
    %107 = vector.broadcast %106 : vector<16x1xf32> to vector<16x32xf32>
    %108 = arith.mulf %103, %107 : vector<16x32xf32>
    %109 = vector.broadcast %88 : vector<1x32xf32> to vector<16x32xf32>
    %110 = arith.mulf %108, %109 : vector<16x32xf32>
    %111 = vector.broadcast %90 : vector<1x32xf32> to vector<16x32xf32>
    %112 = arith.addf %110, %111 : vector<16x32xf32>
    %c0_47 = arith.constant 0 : index
    %c0_48 = arith.constant 0 : index
    %c0_49 = arith.constant 0 : index
    %113 = vector.load %arg10[%c0_47, %c0_48, %c0_49] : memref<1x32x128xf32, #tpu.memory_space<vmem>>, vector<1x32x128xf32>
    %114 = vector.shape_cast %113 : vector<1x32x128xf32> to vector<32x128xf32>
    %cst_50 = arith.constant dense<0.000000e+00> : vector<16x128xf32>
    %115 = tpu.matmul %112, %114, %cst_50 {dimension_numbers = #tpu.dot_dimension_numbers<[1], [0], [0], [1], [0, 0, 1, 1], [], []>} : vector<16x32xf32>, vector<32x128xf32>, vector<16x128xf32> -> vector<16x128xf32>
    %c0_51 = arith.constant 0 : index
    %c0_52 = arith.constant 0 : index
    %c0_53 = arith.constant 0 : index
    %116 = vector.load %arg11[%c0_51, %c0_52, %c0_53] : memref<1x1x128xf32, #tpu.memory_space<vmem>>, vector<1x1x128xf32>
    %117 = vector.shape_cast %116 : vector<1x1x128xf32> to vector<1x128xf32>
    %118 = vector.broadcast %117 : vector<1x128xf32> to vector<16x128xf32>
    %119 = arith.addf %115, %118 : vector<16x128xf32>
    %c0_54 = arith.constant 0 : index
    %c0_55 = arith.constant 0 : index
    %c0_56 = arith.constant 0 : index
    %120 = vector.load %arg12[%c0_54, %c0_55, %c0_56] : memref<1x32x128xf32, #tpu.memory_space<vmem>>, vector<1x32x128xf32>
    %121 = vector.shape_cast %120 : vector<1x32x128xf32> to vector<32x128xf32>
    %cst_57 = arith.constant dense<0.000000e+00> : vector<16x128xf32>
    %122 = tpu.matmul %112, %121, %cst_57 {dimension_numbers = #tpu.dot_dimension_numbers<[1], [0], [0], [1], [0, 0, 1, 1], [], []>} : vector<16x32xf32>, vector<32x128xf32>, vector<16x128xf32> -> vector<16x128xf32>
    %c0_58 = arith.constant 0 : index
    %c0_59 = arith.constant 0 : index
    %c0_60 = arith.constant 0 : index
    %123 = vector.load %arg13[%c0_58, %c0_59, %c0_60] : memref<1x1x128xf32, #tpu.memory_space<vmem>>, vector<1x1x128xf32>
    %124 = vector.shape_cast %123 : vector<1x1x128xf32> to vector<1x128xf32>
    %125 = vector.broadcast %124 : vector<1x128xf32> to vector<16x128xf32>
    %126 = arith.addf %122, %125 : vector<16x128xf32>
    %cst_61 = arith.constant 5.000000e-01 : f32
    %127 = vector.broadcast %cst_61 : f32 to vector<16x128xf32>
    %128 = arith.mulf %127, %126 : vector<16x128xf32>
    %cst_62 = arith.constant 0.707106769 : f32
    %129 = vector.broadcast %cst_62 : f32 to vector<16x128xf32>
    %130 = arith.mulf %126, %129 : vector<16x128xf32>
    %131 = math.erf %130 : vector<16x128xf32>
    %cst_63 = arith.constant 1.000000e+00 : f32
    %132 = vector.broadcast %cst_63 : f32 to vector<16x128xf32>
    %133 = arith.addf %132, %131 : vector<16x128xf32>
    %134 = arith.mulf %128, %133 : vector<16x128xf32>
    %135 = arith.mulf %119, %134 : vector<16x128xf32>
    %c0_64 = arith.constant 0 : index
    %c0_65 = arith.constant 0 : index
    %c0_66 = arith.constant 0 : index
    %136 = vector.load %arg14[%c0_64, %c0_65, %c0_66] : memref<1x128x32xf32, #tpu.memory_space<vmem>>, vector<1x128x32xf32>
    %137 = vector.shape_cast %136 : vector<1x128x32xf32> to vector<128x32xf32>
    %cst_67 = arith.constant dense<0.000000e+00> : vector<16x32xf32>
    %138 = tpu.matmul %135, %137, %cst_67 {dimension_numbers = #tpu.dot_dimension_numbers<[1], [0], [0], [1], [0, 0, 1, 1], [], []>} : vector<16x128xf32>, vector<128x32xf32>, vector<16x32xf32> -> vector<16x32xf32>
    %c0_68 = arith.constant 0 : index
    %c0_69 = arith.constant 0 : index
    %c0_70 = arith.constant 0 : index
    %139 = vector.load %arg15[%c0_68, %c0_69, %c0_70] : memref<1x1x32xf32, #tpu.memory_space<vmem>>, vector<1x1x32xf32>
    %140 = vector.shape_cast %139 : vector<1x1x32xf32> to vector<1x32xf32>
    %141 = vector.broadcast %140 : vector<1x32xf32> to vector<16x32xf32>
    %142 = arith.addf %138, %141 : vector<16x32xf32>
    %143 = arith.addf %86, %142 : vector<16x32xf32>
    %144 = vector.shape_cast %143 : vector<16x32xf32> to vector<2x8x32xf32>
    %c0_71 = arith.constant 0 : index
    %c0_72 = arith.constant 0 : index
    %c0_73 = arith.constant 0 : index
    %145 = vector.load %arg17[%c0_71, %c0_72, %c0_73] : memref<2x8x32xf32, #tpu.memory_space<vmem>>, vector<2x8x32xf32>
    tpu.vector_store %arg17[%c0_71, %c0_72, %c0_73], %144 {strides = array<i32>} : memref<2x8x32xf32, #tpu.memory_space<vmem>>, vector<2x8x32xf32>,
    %c1_i32 = arith.constant 1 : i32
    %146 = arith.cmpi eq, %arg1, %c1_i32 : i32
    %147 = arith.extui %146 : i1 to i32
    %c0_i32_74 = arith.constant 0 : i32
    %148 = arith.cmpi ne, %147, %c0_i32_74 : i32
    scf.if %148 {
      %149 = vector.shape_cast %143 : vector<16x32xf32> to vector<2x8x32xf32>
      %c0_75 = arith.constant 0 : index
      %c0_76 = arith.constant 0 : index
      %c0_77 = arith.constant 0 : index
      %150 = vector.load %arg16[%c0_75, %c0_76, %c0_77] : memref<2x8x32xf32, #tpu.memory_space<vmem>>, vector<2x8x32xf32>
      tpu.vector_store %arg16[%c0_75, %c0_76, %c0_77], %149 {strides = array<i32>} : memref<2x8x32xf32, #tpu.memory_space<vmem>>, vector<2x8x32xf32>,
    } else {
    }
    return
  }
  func.func @transform_0(%arg0: i32, %arg1: i32) -> (i32, i32, i32) {
    %c0_i32 = arith.constant 0 : i32
    %c0_i32_0 = arith.constant 0 : i32
    %c0_i32_1 = arith.constant 0 : i32
    return %arg0, %c0_i32, %c0_i32_0 : i32, i32, i32
  }
  func.func @transform_1(%arg0: i32, %arg1: i32) -> (i32, i32, i32) {
    %c0_i32 = arith.constant 0 : i32
    %c0_i32_0 = arith.constant 0 : i32
    %c0_i32_1 = arith.constant 0 : i32
    return %arg1, %c0_i32, %c0_i32_0 : i32, i32, i32
  }
  func.func @transform_2(%arg0: i32, %arg1: i32) -> (i32, i32, i32) {
    %c0_i32 = arith.constant 0 : i32
    %c0_i32_0 = arith.constant 0 : i32
    %c0_i32_1 = arith.constant 0 : i32
    return %arg1, %c0_i32, %c0_i32_0 : i32, i32, i32
  }
  func.func @transform_3(%arg0: i32, %arg1: i32) -> (i32, i32, i32) {
    %c0_i32 = arith.constant 0 : i32
    %c0_i32_0 = arith.constant 0 : i32
    %c0_i32_1 = arith.constant 0 : i32
    return %arg1, %c0_i32, %c0_i32_0 : i32, i32, i32
  }
  func.func @transform_4(%arg0: i32, %arg1: i32) -> (i32, i32, i32) {
    %c0_i32 = arith.constant 0 : i32
    %c0_i32_0 = arith.constant 0 : i32
    %c0_i32_1 = arith.constant 0 : i32
    return %arg1, %c0_i32, %c0_i32_0 : i32, i32, i32
  }
  func.func @transform_5(%arg0: i32, %arg1: i32) -> (i32, i32, i32) {
    %c0_i32 = arith.constant 0 : i32
    %c0_i32_0 = arith.constant 0 : i32
    %c0_i32_1 = arith.constant 0 : i32
    return %arg1, %c0_i32, %c0_i32_0 : i32, i32, i32
  }
  func.func @transform_6(%arg0: i32, %arg1: i32) -> (i32, i32, i32) {
    %c0_i32 = arith.constant 0 : i32
    %c0_i32_0 = arith.constant 0 : i32
    %c0_i32_1 = arith.constant 0 : i32
    return %arg1, %c0_i32, %c0_i32_0 : i32, i32, i32
  }
  func.func @transform_7(%arg0: i32, %arg1: i32) -> (i32, i32, i32) {
    %c0_i32 = arith.constant 0 : i32
    %c0_i32_0 = arith.constant 0 : i32
    %c0_i32_1 = arith.constant 0 : i32
    return %arg1, %c0_i32, %c0_i32_0 : i32, i32, i32
  }
  func.func @transform_8(%arg0: i32, %arg1: i32) -> (i32, i32, i32) {
    %c0_i32 = arith.constant 0 : i32
    %c0_i32_0 = arith.constant 0 : i32
    %c0_i32_1 = arith.constant 0 : i32
    return %arg1, %c0_i32, %c0_i32_0 : i32, i32, i32
  }
  func.func @transform_9(%arg0: i32, %arg1: i32) -> (i32, i32, i32) {
    %c0_i32 = arith.constant 0 : i32
    %c0_i32_0 = arith.constant 0 : i32
    %c0_i32_1 = arith.constant 0 : i32
    return %arg1, %c0_i32, %c0_i32_0 : i32, i32, i32
  }
  func.func @transform_10(%arg0: i32, %arg1: i32) -> (i32, i32, i32) {
    %c0_i32 = arith.constant 0 : i32
    %c0_i32_0 = arith.constant 0 : i32
    %c0_i32_1 = arith.constant 0 : i32
    return %arg1, %c0_i32, %c0_i32_0 : i32, i32, i32
  }
  func.func @transform_11(%arg0: i32, %arg1: i32) -> (i32, i32, i32) {
    %c0_i32 = arith.constant 0 : i32
    %c0_i32_0 = arith.constant 0 : i32
    %c0_i32_1 = arith.constant 0 : i32
    return %arg1, %c0_i32, %c0_i32_0 : i32, i32, i32
  }
  func.func @transform_12(%arg0: i32, %arg1: i32) -> (i32, i32, i32) {
    %c0_i32 = arith.constant 0 : i32
    %c0_i32_0 = arith.constant 0 : i32
    %c0_i32_1 = arith.constant 0 : i32
    return %arg1, %c0_i32, %c0_i32_0 : i32, i32, i32
  }
  func.func @transform_13(%arg0: i32, %arg1: i32) -> (i32, i32, i32) {
    %c0_i32 = arith.constant 0 : i32
    %c0_i32_0 = arith.constant 0 : i32
    %c0_i32_1 = arith.constant 0 : i32
    return %arg1, %c0_i32, %c0_i32_0 : i32, i32, i32
  }
  func.func @transform_14(%arg0: i32, %arg1: i32) -> (i32, i32, i32) {
    %c0_i32 = arith.constant 0 : i32
    %c0_i32_0 = arith.constant 0 : i32
    %c0_i32_1 = arith.constant 0 : i32
    return %arg0, %c0_i32, %c0_i32_0 : i32, i32, i32
  }
}

</mosaic_0001>

<llo_original>
// kernel: tpu_custom_call.1
$region0: #{tpu_custom_call.1}
  #allocation0 [shape = 'u32[]', space=smem, size = 0x4, offset = 0x4, fixed_abs, tag = 'smem constant byte address 0x4 - core index']
  #allocation1 [shape = 'u32[72,128]{1,0:T(1,128)}', space=vmem, size = 0x9000, scoped, tag = 'internal scratch']
  #allocation2 [shape = 'f32[2,8,32]{2,1,0:T(8,128)}', space=vmem, size = 0x2000, scoped, tag = 'scratch operand']
  %s0 = inlined_call_operand.vmem [shape: f32[4,8,32], index: 0, kind: input, shape index: {}]
  %s1 = inlined_call_operand.vmem [shape: f32[2,1,32], index: 1, kind: input, shape index: {}]
  %s2 = inlined_call_operand.vmem [shape: f32[2,1,32], index: 2, kind: input, shape index: {}]
  %s3 = inlined_call_operand.vmem [shape: f32[2,32,96], index: 3, kind: input, shape index: {}]
  %s4 = inlined_call_operand.vmem [shape: f32[2,32,32], index: 4, kind: input, shape index: {}]
  %s5 = inlined_call_operand.vmem [shape: f32[2,1,32], index: 5, kind: input, shape index: {}]
  %s6 = inlined_call_operand.vmem [shape: f32[2,1,32], index: 6, kind: input, shape index: {}]
  %s7 = inlined_call_operand.vmem [shape: f32[2,1,32], index: 7, kind: input, shape index: {}]
  %s8 = inlined_call_operand.vmem [shape: f32[2,32,128], index: 8, kind: input, shape index: {}]
  %s9 = inlined_call_operand.vmem [shape: f32[2,1,128], index: 9, kind: input, shape index: {}]
  %s10 = inlined_call_operand.vmem [shape: f32[2,32,128], index: 10, kind: input, shape index: {}]
  %s11 = inlined_call_operand.vmem [shape: f32[2,1,128], index: 11, kind: input, shape index: {}]
  %s12 = inlined_call_operand.vmem [shape: f32[2,128,32], index: 12, kind: input, shape index: {}]
  %s13 = inlined_call_operand.vmem [shape: f32[2,1,32], index: 13, kind: input, shape index: {}]
  %s14 = inlined_call_operand.hbm [shape: f32[4,8,32], index: 14, kind: output, shape index: {}]
  %s15 = sld [smem:[#allocation0]]
  $region97: #{tpu_custom_call.1} parent=0
    _
  %s17 = ssub.s32 1, %s15
  %s18 = scalar_select 0, %s17, %s15
  $region1: #{tpu_custom_call.1} parent=0
    #allocation3 [shape = 'u8[16384]{0}', space=vmem, size = 0x4000, scoped, tag = 'output window, operand 0']
    #allocation4 [shape = 's32[2]{0}', space=sflag, size = 0x8, scoped, tag = 'scoped memory for tpu_custom_call.1']
    %19 = vsyncpa [#allocation4], 0
    %s20 = scalar_lea.sflag [#allocation4], 1
    %21 = vsyncpa %s20, 0
    loop: start=0, step=1, limit=6
    $region2: #{tpu_custom_call.1} parent=1 // loop_pre_header
      _
    $region3: #{tpu_custom_call.1} parent=1 // loop_header
      %s23 = sphi 0, %s27
      %p24 = scmp.ge.s32.totalorder %s23, 6
      %s30 = sphi 0, %s42
      %s31 = sphi 0, %s38
      %s32 = sphi 0, %s30
      %s33 = sphi 0, %s31
      %s34 = sphi 0, %s32
      %s35 = sphi 0, %s33
      %s45 = sphi 0, %s47
      %s48 = sphi 0, %s45
      %s49 = sphi 0, %s48
      %s65 = sphi 0, %s49
      %s71 = sphi 0, %s73
      %s74 = sphi 0, %s71
      %s75 = sphi 0, %s74
      %s91 = sphi 0, %s75
      %s97 = sphi 0, %s99
      %s100 = sphi 0, %s97
      %s101 = sphi 0, %s100
      %s117 = sphi 0, %s101
      %s123 = sphi 0, %s125
      %s126 = sphi 0, %s123
      %s127 = sphi 0, %s126
      %s143 = sphi 0, %s127
      %s149 = sphi 0, %s151
      %s152 = sphi 0, %s149
      %s153 = sphi 0, %s152
      %s169 = sphi 0, %s153
      %s175 = sphi 0, %s177
      %s178 = sphi 0, %s175
      %s179 = sphi 0, %s178
      %s195 = sphi 0, %s179
      %s201 = sphi 0, %s203
      %s204 = sphi 0, %s201
      %s205 = sphi 0, %s204
      %s221 = sphi 0, %s205
      %s227 = sphi 0, %s229
      %s230 = sphi 0, %s227
      %s231 = sphi 0, %s230
      %s247 = sphi 0, %s231
      %s253 = sphi 0, %s255
      %s256 = sphi 0, %s253
      %s257 = sphi 0, %s256
      %s273 = sphi 0, %s257
      %s279 = sphi 0, %s281
      %s282 = sphi 0, %s279
      %s283 = sphi 0, %s282
      %s299 = sphi 0, %s283
      %s305 = sphi 0, %s307
      %s308 = sphi 0, %s305
      %s309 = sphi 0, %s308
      %s325 = sphi 0, %s309
      %s331 = sphi 0, %s333
      %s334 = sphi 0, %s331
      %s335 = sphi 0, %s334
      %s351 = sphi 0, %s335
      %s357 = sphi 0, %s359
      %s360 = sphi 0, %s357
      %s361 = sphi 0, %s360
      %s377 = sphi 0, %s361
      %s383 = sphi 0, %s385
      %s386 = sphi 0, %s383
      %s387 = sphi 0, %s386
      %s403 = sphi 0, %s387
      %s409 = sphi 0, %s411
      %s412 = sphi 0, %s409
      %s413 = sphi 0, %s412
      %s429 = sphi 0, %s413
    $region4: #{tpu_custom_call.1} parent=1 // loop_header_branch
      %26 = sbr.rel (%p24) target = $region8
    $region5: #{tpu_custom_call.1} parent=1 // loop_body
      %s28 = ssub.s32 %s23, 1
      %s29 = ssub.s32 %s23, 2
      %s36 = sadd.s32 1, %s31
      %p37 = scmp.ge.s32.totalorder %s36, 2
      %s38 = scalar_select %p37, 0, %s36
      %s39 = sadd.s32 1, %s30
      %s40 = scalar_select %p37, %s39, %s30
      %p41 = scmp.ge.s32.totalorder %s40, 2
      %s42 = scalar_select %p41, 0, %s40
      %s43 = ssub.s32 %s30, %s42
      %p44 = scmp.eq.s32.totalorder %s43, 0
      %s46 = sadd.s32 %s45, 1
      %s47 = scalar_select %p44, %s45, %s46
      %p50 = pneg %p44
      %p51 = scmp.eq.s32.totalorder %s23, 3
      %p52 = por %p50, %p51
      %p53 = scmp.ne.s32.totalorder %s45, %s48
      %p54 = scmp.eq.s32.totalorder %s23, 0
      %p55 = por %p53, %p54
      %p56 = scmp.ne.s32.totalorder %s45, %s48
      %p57 = scmp.eq.s32.totalorder %s28, 3
      %p58 = por %p56, %p57
      %p59 = scmp.ne.s32.totalorder %s48, %s49
      %p60 = scmp.eq.s32.totalorder %s28, 0
      %p61 = por %p59, %p60
      %p62 = scmp.ne.s32.totalorder %s48, %s49
      %p63 = scmp.eq.s32.totalorder %s29, 3
      %p64 = por %p62, %p63
      %p66 = scmp.ne.s32.totalorder %s49, %s65
      %p67 = scmp.eq.s32.totalorder %s29, 0
      %p68 = por %p66, %p67
      %s69 = ssub.s32 %s31, %s38
      %p70 = scmp.eq.s32.totalorder %s69, 0
      %s72 = sadd.s32 %s71, 1
      %s73 = scalar_select %p70, %s71, %s72
      %p76 = pneg %p70
      %p77 = scmp.eq.s32.totalorder %s23, 3
      %p78 = por %p76, %p77
      %p79 = scmp.ne.s32.totalorder %s71, %s74
      %p80 = scmp.eq.s32.totalorder %s23, 0
      %p81 = por %p79, %p80
      %p82 = scmp.ne.s32.totalorder %s71, %s74
      %p83 = scmp.eq.s32.totalorder %s28, 3
      %p84 = por %p82, %p83
      %p85 = scmp.ne.s32.totalorder %s74, %s75
      %p86 = scmp.eq.s32.totalorder %s28, 0
      %p87 = por %p85, %p86
      %p88 = scmp.ne.s32.totalorder %s74, %s75
      %p89 = scmp.eq.s32.totalorder %s29, 3
      %p90 = por %p88, %p89
      %p92 = scmp.ne.s32.totalorder %s75, %s91
      %p93 = scmp.eq.s32.totalorder %s29, 0
      %p94 = por %p92, %p93
      %s95 = ssub.s32 %s31, %s38
      %p96 = scmp.eq.s32.totalorder %s95, 0
      %s98 = sadd.s32 %s97, 1
      %s99 = scalar_select %p96, %s97, %s98
      %p102 = pneg %p96
      %p103 = scmp.eq.s32.totalorder %s23, 3
      %p104 = por %p102, %p103
      %p105 = scmp.ne.s32.totalorder %s97, %s100
      %p106 = scmp.eq.s32.totalorder %s23, 0
      %p107 = por %p105, %p106
      %p108 = scmp.ne.s32.totalorder %s97, %s100
      %p109 = scmp.eq.s32.totalorder %s28, 3
      %p110 = por %p108, %p109
      %p111 = scmp.ne.s32.totalorder %s100, %s101
      %p112 = scmp.eq.s32.totalorder %s28, 0
      %p113 = por %p111, %p112
      %p114 = scmp.ne.s32.totalorder %s100, %s101
      %p115 = scmp.eq.s32.totalorder %s29, 3
      %p116 = por %p114, %p115
      %p118 = scmp.ne.s32.totalorder %s101, %s117
      %p119 = scmp.eq.s32.totalorder %s29, 0
      %p120 = por %p118, %p119
      %s121 = ssub.s32 %s31, %s38
      %p122 = scmp.eq.s32.totalorder %s121, 0
      %s124 = sadd.s32 %s123, 1
      %s125 = scalar_select %p122, %s123, %s124
      %p128 = pneg %p122
      %p129 = scmp.eq.s32.totalorder %s23, 3
      %p130 = por %p128, %p129
      %p131 = scmp.ne.s32.totalorder %s123, %s126
      %p132 = scmp.eq.s32.totalorder %s23, 0
      %p133 = por %p131, %p132
      %p134 = scmp.ne.s32.totalorder %s123, %s126
      %p135 = scmp.eq.s32.totalorder %s28, 3
      %p136 = por %p134, %p135
      %p137 = scmp.ne.s32.totalorder %s126, %s127
      %p138 = scmp.eq.s32.totalorder %s28, 0
      %p139 = por %p137, %p138
      %p140 = scmp.ne.s32.totalorder %s126, %s127
      %p141 = scmp.eq.s32.totalorder %s29, 3
      %p142 = por %p140, %p141
      %p144 = scmp.ne.s32.totalorder %s127, %s143
      %p145 = scmp.eq.s32.totalorder %s29, 0
      %p146 = por %p144, %p145
      %s147 = ssub.s32 %s31, %s38
      %p148 = scmp.eq.s32.totalorder %s147, 0
      %s150 = sadd.s32 %s149, 1
      %s151 = scalar_select %p148, %s149, %s150
      %p154 = pneg %p148
      %p155 = scmp.eq.s32.totalorder %s23, 3
      %p156 = por %p154, %p155
      %p157 = scmp.ne.s32.totalorder %s149, %s152
      %p158 = scmp.eq.s32.totalorder %s23, 0
      %p159 = por %p157, %p158
      %p160 = scmp.ne.s32.totalorder %s149, %s152
      %p161 = scmp.eq.s32.totalorder %s28, 3
      %p162 = por %p160, %p161
      %p163 = scmp.ne.s32.totalorder %s152, %s153
      %p164 = scmp.eq.s32.totalorder %s28, 0
      %p165 = por %p163, %p164
      %p166 = scmp.ne.s32.totalorder %s152, %s153
      %p167 = scmp.eq.s32.totalorder %s29, 3
      %p168 = por %p166, %p167
      %p170 = scmp.ne.s32.totalorder %s153, %s169
      %p171 = scmp.eq.s32.totalorder %s29, 0
      %p172 = por %p170, %p171
      %s173 = ssub.s32 %s31, %s38
      %p174 = scmp.eq.s32.totalorder %s173, 0
      %s176 = sadd.s32 %s175, 1
      %s177 = scalar_select %p174, %s175, %s176
      %p180 = pneg %p174
      %p181 = scmp.eq.s32.totalorder %s23, 3
      %p182 = por %p180, %p181
      %p183 = scmp.ne.s32.totalorder %s175, %s178
      %p184 = scmp.eq.s32.totalorder %s23, 0
      %p185 = por %p183, %p184
      %p186 = scmp.ne.s32.totalorder %s175, %s178
      %p187 = scmp.eq.s32.totalorder %s28, 3
      %p188 = por %p186, %p187
      %p189 = scmp.ne.s32.totalorder %s178, %s179
      %p190 = scmp.eq.s32.totalorder %s28, 0
      %p191 = por %p189, %p190
      %p192 = scmp.ne.s32.totalorder %s178, %s179
      %p193 = scmp.eq.s32.totalorder %s29, 3
      %p194 = por %p192, %p193
      %p196 = scmp.ne.s32.totalorder %s179, %s195
      %p197 = scmp.eq.s32.totalorder %s29, 0
      %p198 = por %p196, %p197
      %s199 = ssub.s32 %s31, %s38
      %p200 = scmp.eq.s32.totalorder %s199, 0
      %s202 = sadd.s32 %s201, 1
      %s203 = scalar_select %p200, %s201, %s202
      %p206 = pneg %p200
      %p207 = scmp.eq.s32.totalorder %s23, 3
      %p208 = por %p206, %p207
      %p209 = scmp.ne.s32.totalorder %s201, %s204
      %p210 = scmp.eq.s32.totalorder %s23, 0
      %p211 = por %p209, %p210
      %p212 = scmp.ne.s32.totalorder %s201, %s204
      %p213 = scmp.eq.s32.totalorder %s28, 3
      %p214 = por %p212, %p213
      %p215 = scmp.ne.s32.totalorder %s204, %s205
      %p216 = scmp.eq.s32.totalorder %s28, 0
      %p217 = por %p215, %p216
      %p218 = scmp.ne.s32.totalorder %s204, %s205
      %p219 = scmp.eq.s32.totalorder %s29, 3
      %p220 = por %p218, %p219
      %p222 = scmp.ne.s32.totalorder %s205, %s221
      %p223 = scmp.eq.s32.totalorder %s29, 0
      %p224 = por %p222, %p223
      %s225 = ssub.s32 %s31, %s38
      %p226 = scmp.eq.s32.totalorder %s225, 0
      %s228 = sadd.s32 %s227, 1
      %s229 = scalar_select %p226, %s227, %s228
      %p232 = pneg %p226
      %p233 = scmp.eq.s32.totalorder %s23, 3
      %p234 = por %p232, %p233
      %p235 = scmp.ne.s32.totalorder %s227, %s230
      %p236 = scmp.eq.s32.totalorder %s23, 0
      %p237 = por %p235, %p236
      %p238 = scmp.ne.s32.totalorder %s227, %s230
      %p239 = scmp.eq.s32.totalorder %s28, 3
      %p240 = por %p238, %p239
      %p241 = scmp.ne.s32.totalorder %s230, %s231
      %p242 = scmp.eq.s32.totalorder %s28, 0
      %p243 = por %p241, %p242
      %p244 = scmp.ne.s32.totalorder %s230, %s231
      %p245 = scmp.eq.s32.totalorder %s29, 3
      %p246 = por %p244, %p245
      %p248 = scmp.ne.s32.totalorder %s231, %s247
      %p249 = scmp.eq.s32.totalorder %s29, 0
      %p250 = por %p248, %p249
      %s251 = ssub.s32 %s31, %s38
      %p252 = scmp.eq.s32.totalorder %s251, 0
      %s254 = sadd.s32 %s253, 1
      %s255 = scalar_select %p252, %s253, %s254
      %p258 = pneg %p252
      %p259 = scmp.eq.s32.totalorder %s23, 3
      %p260 = por %p258, %p259
      %p261 = scmp.ne.s32.totalorder %s253, %s256
      %p262 = scmp.eq.s32.totalorder %s23, 0
      %p263 = por %p261, %p262
      %p264 = scmp.ne.s32.totalorder %s253, %s256
      %p265 = scmp.eq.s32.totalorder %s28, 3
      %p266 = por %p264, %p265
      %p267 = scmp.ne.s32.totalorder %s256, %s257
      %p268 = scmp.eq.s32.totalorder %s28, 0
      %p269 = por %p267, %p268
      %p270 = scmp.ne.s32.totalorder %s256, %s257
      %p271 = scmp.eq.s32.totalorder %s29, 3
      %p272 = por %p270, %p271
      %p274 = scmp.ne.s32.totalorder %s257, %s273
      %p275 = scmp.eq.s32.totalorder %s29, 0
      %p276 = por %p274, %p275
      %s277 = ssub.s32 %s31, %s38
      %p278 = scmp.eq.s32.totalorder %s277, 0
      %s280 = sadd.s32 %s279, 1
      %s281 = scalar_select %p278, %s279, %s280
      %p284 = pneg %p278
      %p285 = scmp.eq.s32.totalorder %s23, 3
      %p286 = por %p284, %p285
      %p287 = scmp.ne.s32.totalorder %s279, %s282
      %p288 = scmp.eq.s32.totalorder %s23, 0
      %p289 = por %p287, %p288
      %p290 = scmp.ne.s32.totalorder %s279, %s282
      %p291 = scmp.eq.s32.totalorder %s28, 3
      %p292 = por %p290, %p291
      %p293 = scmp.ne.s32.totalorder %s282, %s283
      %p294 = scmp.eq.s32.totalorder %s28, 0
      %p295 = por %p293, %p294
      %p296 = scmp.ne.s32.totalorder %s282, %s283
      %p297 = scmp.eq.s32.totalorder %s29, 3
      %p298 = por %p296, %p297
      %p300 = scmp.ne.s32.totalorder %s283, %s299
      %p301 = scmp.eq.s32.totalorder %s29, 0
      %p302 = por %p300, %p301
      %s303 = ssub.s32 %s31, %s38
      %p304 = scmp.eq.s32.totalorder %s303, 0
      %s306 = sadd.s32 %s305, 1
      %s307 = scalar_select %p304, %s305, %s306
      %p310 = pneg %p304
      %p311 = scmp.eq.s32.totalorder %s23, 3
      %p312 = por %p310, %p311
      %p313 = scmp.ne.s32.totalorder %s305, %s308
      %p314 = scmp.eq.s32.totalorder %s23, 0
      %p315 = por %p313, %p314
      %p316 = scmp.ne.s32.totalorder %s305, %s308
      %p317 = scmp.eq.s32.totalorder %s28, 3
      %p318 = por %p316, %p317
      %p319 = scmp.ne.s32.totalorder %s308, %s309
      %p320 = scmp.eq.s32.totalorder %s28, 0
      %p321 = por %p319, %p320
      %p322 = scmp.ne.s32.totalorder %s308, %s309
      %p323 = scmp.eq.s32.totalorder %s29, 3
      %p324 = por %p322, %p323
      %p326 = scmp.ne.s32.totalorder %s309, %s325
      %p327 = scmp.eq.s32.totalorder %s29, 0
      %p328 = por %p326, %p327
      %s329 = ssub.s32 %s31, %s38
      %p330 = scmp.eq.s32.totalorder %s329, 0
      %s332 = sadd.s32 %s331, 1
      %s333 = scalar_select %p330, %s331, %s332
      %p336 = pneg %p330
      %p337 = scmp.eq.s32.totalorder %s23, 3
      %p338 = por %p336, %p337
      %p339 = scmp.ne.s32.totalorder %s331, %s334
      %p340 = scmp.eq.s32.totalorder %s23, 0
      %p341 = por %p339, %p340
      %p342 = scmp.ne.s32.totalorder %s331, %s334
      %p343 = scmp.eq.s32.totalorder %s28, 3
      %p344 = por %p342, %p343
      %p345 = scmp.ne.s32.totalorder %s334, %s335
      %p346 = scmp.eq.s32.totalorder %s28, 0
      %p347 = por %p345, %p346
      %p348 = scmp.ne.s32.totalorder %s334, %s335
      %p349 = scmp.eq.s32.totalorder %s29, 3
      %p350 = por %p348, %p349
      %p352 = scmp.ne.s32.totalorder %s335, %s351
      %p353 = scmp.eq.s32.totalorder %s29, 0
      %p354 = por %p352, %p353
      %s355 = ssub.s32 %s31, %s38
      %p356 = scmp.eq.s32.totalorder %s355, 0
      %s358 = sadd.s32 %s357, 1
      %s359 = scalar_select %p356, %s357, %s358
      %p362 = pneg %p356
      %p363 = scmp.eq.s32.totalorder %s23, 3
      %p364 = por %p362, %p363
      %p365 = scmp.ne.s32.totalorder %s357, %s360
      %p366 = scmp.eq.s32.totalorder %s23, 0
      %p367 = por %p365, %p366
      %p368 = scmp.ne.s32.totalorder %s357, %s360
      %p369 = scmp.eq.s32.totalorder %s28, 3
      %p370 = por %p368, %p369
      %p371 = scmp.ne.s32.totalorder %s360, %s361
      %p372 = scmp.eq.s32.totalorder %s28, 0
      %p373 = por %p371, %p372
      %p374 = scmp.ne.s32.totalorder %s360, %s361
      %p375 = scmp.eq.s32.totalorder %s29, 3
      %p376 = por %p374, %p375
      %p378 = scmp.ne.s32.totalorder %s361, %s377
      %p379 = scmp.eq.s32.totalorder %s29, 0
      %p380 = por %p378, %p379
      %s381 = ssub.s32 %s31, %s38
      %p382 = scmp.eq.s32.totalorder %s381, 0
      %s384 = sadd.s32 %s383, 1
      %s385 = scalar_select %p382, %s383, %s384
      %p388 = pneg %p382
      %p389 = scmp.eq.s32.totalorder %s23, 3
      %p390 = por %p388, %p389
      %p391 = scmp.ne.s32.totalorder %s383, %s386
      %p392 = scmp.eq.s32.totalorder %s23, 0
      %p393 = por %p391, %p392
      %p394 = scmp.ne.s32.totalorder %s383, %s386
      %p395 = scmp.eq.s32.totalorder %s28, 3
      %p396 = por %p394, %p395
      %p397 = scmp.ne.s32.totalorder %s386, %s387
      %p398 = scmp.eq.s32.totalorder %s28, 0
      %p399 = por %p397, %p398
      %p400 = scmp.ne.s32.totalorder %s386, %s387
      %p401 = scmp.eq.s32.totalorder %s29, 3
      %p402 = por %p400, %p401
      %p404 = scmp.ne.s32.totalorder %s387, %s403
      %p405 = scmp.eq.s32.totalorder %s29, 0
      %p406 = por %p404, %p405
      %s407 = ssub.s32 %s30, %s42
      %p408 = scmp.eq.s32.totalorder %s407, 0
      %s410 = sadd.s32 %s409, 1
      %s411 = scalar_select %p408, %s409, %s410
      %p414 = pneg %p408
      %p415 = scmp.eq.s32.totalorder %s23, 3
      %p416 = por %p414, %p415
      %p417 = scmp.ne.s32.totalorder %s409, %s412
      %p418 = scmp.eq.s32.totalorder %s23, 0
      %p419 = por %p417, %p418
      %p420 = scmp.ne.s32.totalorder %s409, %s412
      %p421 = scmp.eq.s32.totalorder %s28, 3
      %p422 = por %p420, %p421
      %p423 = scmp.ne.s32.totalorder %s412, %s413
      %p424 = scmp.eq.s32.totalorder %s28, 0
      %p425 = por %p423, %p424
      %p426 = scmp.ne.s32.totalorder %s412, %s413
      %p427 = scmp.eq.s32.totalorder %s29, 3
      %p428 = por %p426, %p427
      %p430 = scmp.ne.s32.totalorder %s413, %s429
      %p431 = scmp.eq.s32.totalorder %s29, 0
      %p432 = por %p430, %p431
      %p433 = scmp.le.s32.totalorder 1, %s23
      %p434 = scmp.lt.s32.totalorder %s23, 5
      %p435 = pnand %p433, %p434
      %p436 = pneg %p435
      // Predicated region
      $region9: #{tpu_custom_call.1} parent=5 // pred_check
        _
      $region10: #{tpu_custom_call.1} parent=5 // pred_check_branch
        %438 = sbr.rel (%p435) target = $region12
      $region11: #{tpu_custom_call.1} parent=5 // pred_region
        %s439 = ssub.s32 %s23, 1
      $region12: #{tpu_custom_call.1} parent=5 // pred_fallthru
        _
      %p440 = scmp.lt.s32.totalorder %s23, 4
      // Predicated region
      $region13: #{tpu_custom_call.1} parent=5 // pred_check
        %p441 = pneg %p440
      $region14: #{tpu_custom_call.1} parent=5 // pred_check_branch
        %443 = sbr.rel (%p441) target = $region16
      $region15: #{tpu_custom_call.1} parent=5 // pred_region
        // Predicated region
        $region17: #{tpu_custom_call.1} parent=15 // pred_check
          %p444 = pneg %p55
        $region18: #{tpu_custom_call.1} parent=15 // pred_check_branch
          %446 = sbr.rel (%p444) target = $region20
        $region19: #{tpu_custom_call.1} parent=15 // pred_region
          %s447 = smul.u32 2, %s30
          %p448 = scmp.lt.s32.totalorder %s447, 3
          %s449 = scalar_select %p448, %s447, 3
          %s450 = smul.addr %s449, 8
          %s451 = scalar_lea.vmem %s0, %s450
          %s452 = smul.u32 2, %s30
        $region20: #{tpu_custom_call.1} parent=15 // pred_fallthru
          _
        // Predicated region
        $region21: #{tpu_custom_call.1} parent=15 // pred_check
          %p453 = pneg %p81
        $region22: #{tpu_custom_call.1} parent=15 // pred_check_branch
          %455 = sbr.rel (%p453) target = $region24
        $region23: #{tpu_custom_call.1} parent=15 // pred_region
          %p456 = scmp.lt.s32.totalorder %s31, 1
          %s457 = scalar_select %p456, %s31, 1
          %s458 = scalar_lea.vmem %s1, %s457
        $region24: #{tpu_custom_call.1} parent=15 // pred_fallthru
          _
        // Predicated region
        $region25: #{tpu_custom_call.1} parent=15 // pred_check
          %p459 = pneg %p107
        $region26: #{tpu_custom_call.1} parent=15 // pred_check_branch
          %461 = sbr.rel (%p459) target = $region28
        $region27: #{tpu_custom_call.1} parent=15 // pred_region
          %p462 = scmp.lt.s32.totalorder %s31, 1
          %s463 = scalar_select %p462, %s31, 1
          %s464 = scalar_lea.vmem %s2, %s463
        $region28: #{tpu_custom_call.1} parent=15 // pred_fallthru
          _
        // Predicated region
        $region29: #{tpu_custom_call.1} parent=15 // pred_check
          %p465 = pneg %p133
        $region30: #{tpu_custom_call.1} parent=15 // pred_check_branch
          %467 = sbr.rel (%p465) target = $region32
        $region31: #{tpu_custom_call.1} parent=15 // pred_region
          %p468 = scmp.lt.s32.totalorder %s31, 1
          %s469 = scalar_select %p468, %s31, 1
          %s470 = smul.addr %s469, 4
          %s471 = smul.addr %s470, 8
          %s472 = scalar_lea.vmem %s3, %s471
        $region32: #{tpu_custom_call.1} parent=15 // pred_fallthru
          _
        // Predicated region
        $region33: #{tpu_custom_call.1} parent=15 // pred_check
          %p473 = pneg %p159
        $region34: #{tpu_custom_call.1} parent=15 // pred_check_branch
          %475 = sbr.rel (%p473) target = $region36
        $region35: #{tpu_custom_call.1} parent=15 // pred_region
          %p476 = scmp.lt.s32.totalorder %s31, 1
          %s477 = scalar_select %p476, %s31, 1
          %s478 = smul.addr %s477, 4
          %s479 = smul.addr %s478, 8
          %s480 = scalar_lea.vmem %s4, %s479
        $region36: #{tpu_custom_call.1} parent=15 // pred_fallthru
          _
        // Predicated region
        $region37: #{tpu_custom_call.1} parent=15 // pred_check
          %p481 = pneg %p185
        $region38: #{tpu_custom_call.1} parent=15 // pred_check_branch
          %483 = sbr.rel (%p481) target = $region40
        $region39: #{tpu_custom_call.1} parent=15 // pred_region
          %p484 = scmp.lt.s32.totalorder %s31, 1
          %s485 = scalar_select %p484, %s31, 1
          %s486 = scalar_lea.vmem %s5, %s485
        $region40: #{tpu_custom_call.1} parent=15 // pred_fallthru
          _
        // Predicated region
        $region41: #{tpu_custom_call.1} parent=15 // pred_check
          %p487 = pneg %p211
        $region42: #{tpu_custom_call.1} parent=15 // pred_check_branch
          %489 = sbr.rel (%p487) target = $region44
        $region43: #{tpu_custom_call.1} parent=15 // pred_region
          %p490 = scmp.lt.s32.totalorder %s31, 1
          %s491 = scalar_select %p490, %s31, 1
          %s492 = scalar_lea.vmem %s6, %s491
        $region44: #{tpu_custom_call.1} parent=15 // pred_fallthru
          _
        // Predicated region
        $region45: #{tpu_custom_call.1} parent=15 // pred_check
          %p493 = pneg %p237
        $region46: #{tpu_custom_call.1} parent=15 // pred_check_branch
          %495 = sbr.rel (%p493) target = $region48
        $region47: #{tpu_custom_call.1} parent=15 // pred_region
          %p496 = scmp.lt.s32.totalorder %s31, 1
          %s497 = scalar_select %p496, %s31, 1
          %s498 = scalar_lea.vmem %s7, %s497
        $region48: #{tpu_custom_call.1} parent=15 // pred_fallthru
          _
        // Predicated region
        $region49: #{tpu_custom_call.1} parent=15 // pred_check
          %p499 = pneg %p263
        $region50: #{tpu_custom_call.1} parent=15 // pred_check_branch
          %501 = sbr.rel (%p499) target = $region52
        $region51: #{tpu_custom_call.1} parent=15 // pred_region
          %p502 = scmp.lt.s32.totalorder %s31, 1
          %s503 = scalar_select %p502, %s31, 1
          %s504 = smul.addr %s503, 4
          %s505 = smul.addr %s504, 8
          %s506 = scalar_lea.vmem %s8, %s505
        $region52: #{tpu_custom_call.1} parent=15 // pred_fallthru
          _
        // Predicated region
        $region53: #{tpu_custom_call.1} parent=15 // pred_check
          %p507 = pneg %p289
        $region54: #{tpu_custom_call.1} parent=15 // pred_check_branch
          %509 = sbr.rel (%p507) target = $region56
        $region55: #{tpu_custom_call.1} parent=15 // pred_region
          %p510 = scmp.lt.s32.totalorder %s31, 1
          %s511 = scalar_select %p510, %s31, 1
          %s512 = scalar_lea.vmem %s9, %s511
        $region56: #{tpu_custom_call.1} parent=15 // pred_fallthru
          _
        // Predicated region
        $region57: #{tpu_custom_call.1} parent=15 // pred_check
          %p513 = pneg %p315
        $region58: #{tpu_custom_call.1} parent=15 // pred_check_branch
          %515 = sbr.rel (%p513) target = $region60
        $region59: #{tpu_custom_call.1} parent=15 // pred_region
          %p516 = scmp.lt.s32.totalorder %s31, 1
          %s517 = scalar_select %p516, %s31, 1
          %s518 = smul.addr %s517, 4
          %s519 = smul.addr %s518, 8
          %s520 = scalar_lea.vmem %s10, %s519
        $region60: #{tpu_custom_call.1} parent=15 // pred_fallthru
          _
        // Predicated region
        $region61: #{tpu_custom_call.1} parent=15 // pred_check
          %p521 = pneg %p341
        $region62: #{tpu_custom_call.1} parent=15 // pred_check_branch
          %523 = sbr.rel (%p521) target = $region64
        $region63: #{tpu_custom_call.1} parent=15 // pred_region
          %p524 = scmp.lt.s32.totalorder %s31, 1
          %s525 = scalar_select %p524, %s31, 1
          %s526 = scalar_lea.vmem %s11, %s525
        $region64: #{tpu_custom_call.1} parent=15 // pred_fallthru
          _
        // Predicated region
        $region65: #{tpu_custom_call.1} parent=15 // pred_check
          %p527 = pneg %p367
        $region66: #{tpu_custom_call.1} parent=15 // pred_check_branch
          %529 = sbr.rel (%p527) target = $region68
        $region67: #{tpu_custom_call.1} parent=15 // pred_region
          %p530 = scmp.lt.s32.totalorder %s31, 1
          %s531 = scalar_select %p530, %s31, 1
          %s532 = smul.addr %s531, 16
          %s533 = smul.addr %s532, 8
          %s534 = scalar_lea.vmem %s12, %s533
        $region68: #{tpu_custom_call.1} parent=15 // pred_fallthru
          _
        // Predicated region
        $region69: #{tpu_custom_call.1} parent=15 // pred_check
          %p535 = pneg %p393
        $region70: #{tpu_custom_call.1} parent=15 // pred_check_branch
          %537 = sbr.rel (%p535) target = $region72
        $region71: #{tpu_custom_call.1} parent=15 // pred_region
          %p538 = scmp.lt.s32.totalorder %s31, 1
          %s539 = scalar_select %p538, %s31, 1
          %s540 = scalar_lea.vmem %s13, %s539
        $region72: #{tpu_custom_call.1} parent=15 // pred_fallthru
          _
      $region16: #{tpu_custom_call.1} parent=5 // pred_fallthru
        _
      %p541 = scmp.le.s32.totalorder 1, %s23
      %p542 = scmp.lt.s32.totalorder %s23, 5
      %p543 = pnand %p541, %p542
      %p544 = pneg %p543
      // Predicated region
      $region73: #{tpu_custom_call.1} parent=5 // pred_check
        _
      $region74: #{tpu_custom_call.1} parent=5 // pred_check_branch
        %546 = sbr.rel (%p543) target = $region76
      $region75: #{tpu_custom_call.1} parent=5 // pred_region
        %s547 = ssub.s32 %s23, 1
        %s548 = smul.u32 2, %s32
        %p549 = scmp.lt.s32.totalorder %s548, 3
        %s550 = scalar_select %p549, %s548, 3
        %s551 = smul.addr %s550, 8
        %s552 = scalar_lea.vmem %s0, %s551
        %p553 = pneg %p61
        %p554 = pneg %p58
        %p555 = scmp.lt.s32.totalorder %s33, 1
        %s556 = scalar_select %p555, %s33, 1
        %s557 = scalar_lea.vmem %s1, %s556
        %p558 = pneg %p87
        %p559 = pneg %p84
        %p560 = scmp.lt.s32.totalorder %s33, 1
        %s561 = scalar_select %p560, %s33, 1
        %s562 = scalar_lea.vmem %s2, %s561
        %p563 = pneg %p113
        %p564 = pneg %p110
        %p565 = scmp.lt.s32.totalorder %s33, 1
        %s566 = scalar_select %p565, %s33, 1
        %s567 = smul.addr %s566, 4
        %s568 = smul.addr %s567, 8
        %s569 = scalar_lea.vmem %s3, %s568
        %p570 = pneg %p139
        %p571 = pneg %p136
        %p572 = scmp.lt.s32.totalorder %s33, 1
        %s573 = scalar_select %p572, %s33, 1
        %s574 = smul.addr %s573, 4
        %s575 = smul.addr %s574, 8
        %s576 = scalar_lea.vmem %s4, %s575
        %p577 = pneg %p165
        %p578 = pneg %p162
        %p579 = scmp.lt.s32.totalorder %s33, 1
        %s580 = scalar_select %p579, %s33, 1
        %s581 = scalar_lea.vmem %s5, %s580
        %p582 = pneg %p191
        %p583 = pneg %p188
        %p584 = scmp.lt.s32.totalorder %s33, 1
        %s585 = scalar_select %p584, %s33, 1
        %s586 = scalar_lea.vmem %s6, %s585
        %p587 = pneg %p217
        %p588 = pneg %p214
        %p589 = scmp.lt.s32.totalorder %s33, 1
        %s590 = scalar_select %p589, %s33, 1
        %s591 = scalar_lea.vmem %s7, %s590
        %p592 = pneg %p243
        %p593 = pneg %p240
        %p594 = scmp.lt.s32.totalorder %s33, 1
        %s595 = scalar_select %p594, %s33, 1
        %s596 = smul.addr %s595, 4
        %s597 = smul.addr %s596, 8
        %s598 = scalar_lea.vmem %s8, %s597
        %p599 = pneg %p269
        %p600 = pneg %p266
        %p601 = scmp.lt.s32.totalorder %s33, 1
        %s602 = scalar_select %p601, %s33, 1
        %s603 = scalar_lea.vmem %s9, %s602
        %p604 = pneg %p295
        %p605 = pneg %p292
        %p606 = scmp.lt.s32.totalorder %s33, 1
        %s607 = scalar_select %p606, %s33, 1
        %s608 = smul.addr %s607, 4
        %s609 = smul.addr %s608, 8
        %s610 = scalar_lea.vmem %s10, %s609
        %p611 = pneg %p321
        %p612 = pneg %p318
        %p613 = scmp.lt.s32.totalorder %s33, 1
        %s614 = scalar_select %p613, %s33, 1
        %s615 = scalar_lea.vmem %s11, %s614
        %p616 = pneg %p347
        %p617 = pneg %p344
        %p618 = scmp.lt.s32.totalorder %s33, 1
        %s619 = scalar_select %p618, %s33, 1
        %s620 = smul.addr %s619, 16
        %s621 = smul.addr %s620, 8
        %s622 = scalar_lea.vmem %s12, %s621
        %p623 = pneg %p373
        %p624 = pneg %p370
        %p625 = scmp.lt.s32.totalorder %s33, 1
        %s626 = scalar_select %p625, %s33, 1
        %s627 = scalar_lea.vmem %s13, %s626
        %p628 = pneg %p399
        %p629 = pneg %p396
        %p630 = pneg %p425
        %p631 = pneg %p422
        %s632 = sand.u32 %s412, 1
        %s633 = scalar_lea.sflag [#allocation4], %s632
        %s634 = sand.u32 %s412, 1
        %s635 = smul.addr %s634, 16
        %s636 = scalar_lea.vmem [#allocation3], %s635
        %s637 = smul.u32 2, %s32
        %p638 = scmp.lt.s32.totalorder %s637, 3
        %s639 = scalar_select %p638, %s637, 3
        %s640 = smul.addr %s639, 8
        %s641 = scalar_lea.vmem %s0, %s640
        %s642 = smul.u32 2, %s32
        %p643 = scmp.lt.s32.totalorder %s33, 1
        %s644 = scalar_select %p643, %s33, 1
        %s645 = scalar_lea.vmem %s1, %s644
        %p646 = scmp.lt.s32.totalorder %s33, 1
        %s647 = scalar_select %p646, %s33, 1
        %s648 = scalar_lea.vmem %s2, %s647
        %p649 = scmp.lt.s32.totalorder %s33, 1
        %s650 = scalar_select %p649, %s33, 1
        %s651 = smul.addr %s650, 4
        %s652 = smul.addr %s651, 8
        %s653 = scalar_lea.vmem %s3, %s652
        %p654 = scmp.lt.s32.totalorder %s33, 1
        %s655 = scalar_select %p654, %s33, 1
        %s656 = smul.addr %s655, 4
        %s657 = smul.addr %s656, 8
        %s658 = scalar_lea.vmem %s4, %s657
        %p659 = scmp.lt.s32.totalorder %s33, 1
        %s660 = scalar_select %p659, %s33, 1
        %s661 = scalar_lea.vmem %s5, %s660
        %p662 = scmp.lt.s32.totalorder %s33, 1
        %s663 = scalar_select %p662, %s33, 1
        %s664 = scalar_lea.vmem %s6, %s663
        %p665 = scmp.lt.s32.totalorder %s33, 1
        %s666 = scalar_select %p665, %s33, 1
        %s667 = scalar_lea.vmem %s7, %s666
        %p668 = scmp.lt.s32.totalorder %s33, 1
        %s669 = scalar_select %p668, %s33, 1
        %s670 = smul.addr %s669, 4
        %s671 = smul.addr %s670, 8
        %s672 = scalar_lea.vmem %s8, %s671
        %p673 = scmp.lt.s32.totalorder %s33, 1
        %s674 = scalar_select %p673, %s33, 1
        %s675 = scalar_lea.vmem %s9, %s674
        %p676 = scmp.lt.s32.totalorder %s33, 1
        %s677 = scalar_select %p676, %s33, 1
        %s678 = smul.addr %s677, 4
        %s679 = smul.addr %s678, 8
        %s680 = scalar_lea.vmem %s10, %s679
        %p681 = scmp.lt.s32.totalorder %s33, 1
        %s682 = scalar_select %p681, %s33, 1
        %s683 = scalar_lea.vmem %s11, %s682
        %p684 = scmp.lt.s32.totalorder %s33, 1
        %s685 = scalar_select %p684, %s33, 1
        %s686 = smul.addr %s685, 16
        %s687 = smul.addr %s686, 8
        %s688 = scalar_lea.vmem %s12, %s687
        %p689 = scmp.lt.s32.totalorder %s33, 1
        %s690 = scalar_select %p689, %s33, 1
        %s691 = scalar_lea.vmem %s13, %s690
        %s692 = smul.u32 2, %s32
        %p693 = scmp.eq.s32.totalorder %s33, 0
        // Predicated region
        $region77: #{tpu_custom_call.1} parent=75 // pred_check
          %p694 = pneg %p693
        $region78: #{tpu_custom_call.1} parent=75 // pred_check_branch
          %696 = sbr.rel (%p694) target = $region80
        $region79: #{tpu_custom_call.1} parent=75 // pred_region
          %v697 = vld [vmem:[%s641] sm:$0xff]
          %v698 = vld [vmem:[%s641 + $0x8] sm:$0xff]
          %vm699 = vcmask 261120
          %700 = vst.msk [vmem:[#allocation2] sm:$0xff] %vm699, %v697
          %701 = vst.msk [vmem:[#allocation2 + $0x8] sm:$0xff] %vm699, %v698
        $region80: #{tpu_custom_call.1} parent=75 // pred_fallthru
          _
        %v702 = vld [vmem:[#allocation2] sm:$0xff]
        %v703 = vld [vmem:[#allocation2 + $0x8] sm:$0xff]
        %v704 = vld [vmem:[%s645] sm:$0x1]
        %v705 = vld [vmem:[%s648] sm:$0x1]
        %vm706 = vcmask 261120
        %v707 = vsel %vm706, %v702, 0.0
        %708 = vadd.xlane.f32.xlu0 %v707
        %v709 = vpop.xlane.xlu0 %708
        %v710 = vsel %vm706, %v703, 0.0
        %711 = vadd.xlane.f32.xlu0 %v710
        %v712 = vpop.xlane.xlu0 %711
        %v713 = vrcp.pop 32.0
        %v714 = vmul.f32 32.0, %v713
        %v715 = vsub.f32 1.0, %v714
        %v716 = vmul.f32 %v713, %v715
        %v717 = vadd.f32 %v713, %v716
        %vm718 = vweird.f32 %v713
        %v719 = vsel %vm718, %v713, %v717
        %v720 = vmul.f32 %v709, %v719
        %v721 = vmul.f32 %v712, %v719
        %v722 = vsub.f32 %v702, %v720
        %v723 = vsub.f32 %v703, %v721
        %v724 = vmul.f32 %v722, %v722
        %v725 = vmul.f32 %v723, %v723
        %v726 = vsel %vm706, %v724, 0.0
        %727 = vadd.xlane.f32.xlu0 %v726
        %v728 = vpop.xlane.xlu0 %727
        %v729 = vsel %vm706, %v725, 0.0
        %730 = vadd.xlane.f32.xlu0 %v729
        %v731 = vpop.xlane.xlu0 %730
        %v732 = vmul.f32 %v728, %v719
        %v733 = vmul.f32 %v731, %v719
        %v734 = vadd.f32 %v732, 1e-05
        %v735 = vadd.f32 %v733, 1e-05
        %v736 = vrsqrt.pop %v734
        %v737 = vmul.f32 %v736, %v734
        %v738 = vmul.f32 %v737, %v736
        %v739 = vmul.f32 0.5, %v738
        %v740 = vsub.f32 1.5, %v739
        %v741 = vmul.f32 %v736, %v740
        %vm742 = vweird.f32 %v734
        %vm743 = vweird.f32 %v736
        %vm744 = vmor %vm742, %vm743
        %v745 = vsel %vm744, %v736, %v741
        %v746 = vrsqrt.pop %v735
        %v747 = vmul.f32 %v746, %v735
        %v748 = vmul.f32 %v747, %v746
        %v749 = vmul.f32 0.5, %v748
        %v750 = vsub.f32 1.5, %v749
        %v751 = vmul.f32 %v746, %v750
        %vm752 = vweird.f32 %v735
        %vm753 = vweird.f32 %v746
        %vm754 = vmor %vm752, %vm753
        %v755 = vsel %vm754, %v746, %v751
        %v756 = vmul.f32 %v722, %v745
        %v757 = vmul.f32 %v723, %v755
        %v759 = vperm.slane %v704, 0
        %v761 = vmul.f32 %v756, %v759
        %v762 = vmul.f32 %v757, %v759
        %v764 = vperm.slane %v705, 0
        %v766 = vadd.f32 %v761, %v764
        %v767 = vadd.f32 %v762, %v764
        %v768 = vld [vmem:[%s653] sm:$0xff]
        %v769 = vld [vmem:[%s653 + $0x8] sm:$0xff]
        %v770 = vld [vmem:[%s653 + $0x10] sm:$0xff]
        %v771 = vld [vmem:[%s653 + $0x18] sm:$0xff]
        %v773 = vsel %vm706, %v766, 0
        %v776 = vsel %vm706, %v767, 0
        %778 = vmatpush.msra.mxu0 0.0
        %779 = vmatpush.msra.mxu0 0.0
        %780 = vmatpush.msra.mxu0 0.0
        %781 = vmatpush.msra.mxu0 0.0
        %782 = vmatpush.msra.mxu0 0.0
        %783 = vmatpush.msra.mxu0 0.0
        %784 = vmatpush.msra.mxu0 0.0
        %785 = vmatpush.msra.mxu0 0.0
        %786 = vmatpush.msra.mxu0 0.0
        %787 = vmatpush.msra.mxu0 0.0
        %788 = vmatpush.msra.mxu0 0.0
        %789 = vmatpush.msra.mxu0 0.0
        %790 = vmatpush.msra.mxu0 %v771
        %791 = vmatpush.msra.mxu0 %v770
        %792 = vmatpush.msra.mxu0 %v769
        %793 = vmatpush.msra.mxu0 %v768
        %794 = vmatmul.f32.gmra.mxu0 %v773
        %v795 = vpop.f32.mrf.mxu0
        %v796 = vadd.f32 0.0, %v795
        %797 = vmatmul.f32.gmra.mxu0 %v776
        %v798 = vpop.f32.mrf.mxu0
        %v799 = vadd.f32 0.0, %v798
        %800 = vdwg.mxu0
        %802 = vrot.lane.b32.xlu0 %v796, 96
        %v803 = vpop.permute.xlu0 %802
        %vm804 = vcmask 130048
        %v805 = vsel %vm804, %v796, 0
        %v807 = vsel %vm804, %v803, 0
        %809 = vmatpush.xpose.msra.mxu0 0.0
        %810 = vmatpush.xpose.msra.mxu0 0.0
        %811 = vmatpush.xpose.msra.mxu0 0.0
        %812 = vmatpush.xpose.msra.mxu0 0.0
        %813 = vmatpush.xpose.msra.mxu0 0.0
        %814 = vmatpush.xpose.msra.mxu0 0.0
        %815 = vmatpush.xpose.msra.mxu0 0.0
        %816 = vmatpush.xpose.msra.mxu0 0.0
        %817 = vmatpush.xpose.msra.mxu0 0.0
        %818 = vmatpush.xpose.msra.mxu0 0.0
        %819 = vmatpush.xpose.msra.mxu0 0.0
        %820 = vmatpush.xpose.msra.mxu0 0.0
        %821 = vmatpush.xpose.msra.mxu0 0.0
        %822 = vmatpush.xpose.msra.mxu0 0.0
        %823 = vmatpush.xpose.msra.mxu0 0.0
        %824 = vmatpush.xpose.msra.mxu0 %v807
        %825 = vmatmul.f32.gmra.mxu0 %v805
        %v826 = vpop.f32.mrf.mxu0
        %v827 = vadd.f32 0.0, %v826
        %828 = vdwg.mxu0
        %830 = vrot.lane.b32.xlu0 %v799, 96
        %v831 = vpop.permute.xlu0 %830
        %v832 = vsel %vm804, %v799, 0
        %v834 = vsel %vm804, %v831, 0
        %836 = vmatpush.xpose.msra.mxu0 0.0
        %837 = vmatpush.xpose.msra.mxu0 0.0
        %838 = vmatpush.xpose.msra.mxu0 0.0
        %839 = vmatpush.xpose.msra.mxu0 0.0
        %840 = vmatpush.xpose.msra.mxu0 0.0
        %841 = vmatpush.xpose.msra.mxu0 0.0
        %842 = vmatpush.xpose.msra.mxu0 0.0
        %843 = vmatpush.xpose.msra.mxu0 0.0
        %844 = vmatpush.xpose.msra.mxu0 0.0
        %845 = vmatpush.xpose.msra.mxu0 0.0
        %846 = vmatpush.xpose.msra.mxu0 0.0
        %847 = vmatpush.xpose.msra.mxu0 0.0
        %848 = vmatpush.xpose.msra.mxu0 0.0
        %849 = vmatpush.xpose.msra.mxu0 0.0
        %850 = vmatpush.xpose.msra.mxu0 0.0
        %851 = vmatpush.xpose.msra.mxu0 %v834
        %852 = vmatmul.f32.gmra.mxu0 %v832
        %v853 = vpop.f32.mrf.mxu0
        %v854 = vadd.f32 0.0, %v853
        %855 = vdwg.mxu0
        %v856 = vmul.f32 %v827, 0.25
        %v857 = vmul.f32 %v854, 0.25
        %vm858 = vcmask 64512
        %v859 = vsel %vm858, %v856, -inf
        %860 = vmax.xlane.f32.xlu0 %v859
        %v861 = vpop.xlane.xlu0 %860
        %v862 = vsel %vm858, %v857, -inf
        %863 = vmax.xlane.f32.xlu0 %v862
        %v864 = vpop.xlane.xlu0 %863
        %v865 = vsub.f32 %v856, %v861
        %v866 = vsub.f32 %v857, %v864
        %v867 = vmul.f32 %v865, 1.442695
        %v868 = vpow.pop %v867
        %v869 = vmul.f32 %v866, 1.442695
        %v870 = vpow.pop %v869
        %v871 = vsel %vm858, %v868, 0.0
        %872 = vadd.xlane.f32.xlu0 %v871
        %v873 = vpop.xlane.xlu0 %872
        %v874 = vsel %vm858, %v870, 0.0
        %875 = vadd.xlane.f32.xlu0 %v874
        %v876 = vpop.xlane.xlu0 %875
        %v877 = vrcp.pop %v873
        %v878 = vrcp.pop %v876
        %v879 = vmul.f32 %v873, %v877
        %v880 = vmul.f32 %v876, %v878
        %v881 = vsub.f32 2.0, %v879
        %v882 = vsub.f32 2.0, %v880
        %v883 = vmul.f32 %v877, %v881
        %v884 = vmul.f32 %v878, %v882
        %v885 = vmul.f32 %v868, %v883
        %v886 = vmul.f32 %v870, %v884
        %887 = vrot.lane.b32.xlu0 %v796, 64
        %v888 = vpop.permute.xlu0 %887
        %v891 = vsel %vm858, %v885, 0
        %893 = vmatpush.msra.mxu0 0.0
        %894 = vmatpush.msra.mxu0 0.0
        %895 = vmatpush.msra.mxu0 0.0
        %896 = vmatpush.msra.mxu0 0.0
        %897 = vmatpush.msra.mxu0 0.0
        %898 = vmatpush.msra.mxu0 0.0
        %899 = vmatpush.msra.mxu0 0.0
        %900 = vmatpush.msra.mxu0 0.0
        %901 = vmatpush.msra.mxu0 0.0
        %902 = vmatpush.msra.mxu0 0.0
        %903 = vmatpush.msra.mxu0 0.0
        %904 = vmatpush.msra.mxu0 0.0
        %905 = vmatpush.msra.mxu0 0.0
        %906 = vmatpush.msra.mxu0 0.0
        %907 = vmatpush.msra.mxu0 0.0
        %908 = vmatpush.msra.mxu0 %v888
        %909 = vmatmul.f32.gmra.mxu0 %v891
        %v910 = vpop.f32.mrf.mxu0
        %v911 = vadd.f32 0.0, %v910
        %912 = vdwg.mxu0
        %913 = vrot.lane.b32.xlu0 %v799, 64
        %v914 = vpop.permute.xlu0 %913
        %v917 = vsel %vm858, %v886, 0
        %919 = vmatpush.msra.mxu0 0.0
        %920 = vmatpush.msra.mxu0 0.0
        %921 = vmatpush.msra.mxu0 0.0
        %922 = vmatpush.msra.mxu0 0.0
        %923 = vmatpush.msra.mxu0 0.0
        %924 = vmatpush.msra.mxu0 0.0
        %925 = vmatpush.msra.mxu0 0.0
        %926 = vmatpush.msra.mxu0 0.0
        %927 = vmatpush.msra.mxu0 0.0
        %928 = vmatpush.msra.mxu0 0.0
        %929 = vmatpush.msra.mxu0 0.0
        %930 = vmatpush.msra.mxu0 0.0
        %931 = vmatpush.msra.mxu0 0.0
        %932 = vmatpush.msra.mxu0 0.0
        %933 = vmatpush.msra.mxu0 0.0
        %934 = vmatpush.msra.mxu0 %v914
        %935 = vmatmul.f32.gmra.mxu0 %v917
        %v936 = vpop.f32.mrf.mxu0
        %v937 = vadd.f32 0.0, %v936
        %938 = vdwg.mxu0
        %939 = vrot.lane.b32.xlu0 %v796, 112
        %v940 = vpop.permute.xlu0 %939
        %941 = vrot.lane.b32.xlu0 %v796, 80
        %v942 = vpop.permute.xlu0 %941
        %v943 = vsel %vm804, %v940, 0
        %v945 = vsel %vm804, %v942, 0
        %947 = vmatpush.xpose.msra.mxu0 0.0
        %948 = vmatpush.xpose.msra.mxu0 0.0
        %949 = vmatpush.xpose.msra.mxu0 0.0
        %950 = vmatpush.xpose.msra.mxu0 0.0
        %951 = vmatpush.xpose.msra.mxu0 0.0
        %952 = vmatpush.xpose.msra.mxu0 0.0
        %953 = vmatpush.xpose.msra.mxu0 0.0
        %954 = vmatpush.xpose.msra.mxu0 0.0
        %955 = vmatpush.xpose.msra.mxu0 0.0
        %956 = vmatpush.xpose.msra.mxu0 0.0
        %957 = vmatpush.xpose.msra.mxu0 0.0
        %958 = vmatpush.xpose.msra.mxu0 0.0
        %959 = vmatpush.xpose.msra.mxu0 0.0
        %960 = vmatpush.xpose.msra.mxu0 0.0
        %961 = vmatpush.xpose.msra.mxu0 0.0
        %962 = vmatpush.xpose.msra.mxu0 %v945
        %963 = vmatmul.f32.gmra.mxu0 %v943
        %v964 = vpop.f32.mrf.mxu0
        %v965 = vadd.f32 0.0, %v964
        %966 = vdwg.mxu0
        %967 = vrot.lane.b32.xlu0 %v799, 112
        %v968 = vpop.permute.xlu0 %967
        %969 = vrot.lane.b32.xlu0 %v799, 80
        %v970 = vpop.permute.xlu0 %969
        %v971 = vsel %vm804, %v968, 0
        %v973 = vsel %vm804, %v970, 0
        %975 = vmatpush.xpose.msra.mxu0 0.0
        %976 = vmatpush.xpose.msra.mxu0 0.0
        %977 = vmatpush.xpose.msra.mxu0 0.0
        %978 = vmatpush.xpose.msra.mxu0 0.0
        %979 = vmatpush.xpose.msra.mxu0 0.0
        %980 = vmatpush.xpose.msra.mxu0 0.0
        %981 = vmatpush.xpose.msra.mxu0 0.0
        %982 = vmatpush.xpose.msra.mxu0 0.0
        %983 = vmatpush.xpose.msra.mxu0 0.0
        %984 = vmatpush.xpose.msra.mxu0 0.0
        %985 = vmatpush.xpose.msra.mxu0 0.0
        %986 = vmatpush.xpose.msra.mxu0 0.0
        %987 = vmatpush.xpose.msra.mxu0 0.0
        %988 = vmatpush.xpose.msra.mxu0 0.0
        %989 = vmatpush.xpose.msra.mxu0 0.0
        %990 = vmatpush.xpose.msra.mxu0 %v973
        %991 = vmatmul.f32.gmra.mxu0 %v971
        %v992 = vpop.f32.mrf.mxu0
        %v993 = vadd.f32 0.0, %v992
        %994 = vdwg.mxu0
        %v995 = vmul.f32 %v965, 0.25
        %v996 = vmul.f32 %v993, 0.25
        %v997 = vsel %vm858, %v995, -inf
        %998 = vmax.xlane.f32.xlu0 %v997
        %v999 = vpop.xlane.xlu0 %998
        %v1000 = vsel %vm858, %v996, -inf
        %1001 = vmax.xlane.f32.xlu0 %v1000
        %v1002 = vpop.xlane.xlu0 %1001
        %v1003 = vsub.f32 %v995, %v999
        %v1004 = vsub.f32 %v996, %v1002
        %v1005 = vmul.f32 %v1003, 1.442695
        %v1006 = vpow.pop %v1005
        %v1007 = vmul.f32 %v1004, 1.442695
        %v1008 = vpow.pop %v1007
        %v1009 = vsel %vm858, %v1006, 0.0
        %1010 = vadd.xlane.f32.xlu0 %v1009
        %v1011 = vpop.xlane.xlu0 %1010
        %v1012 = vsel %vm858, %v1008, 0.0
        %1013 = vadd.xlane.f32.xlu0 %v1012
        %v1014 = vpop.xlane.xlu0 %1013
        %v1015 = vrcp.pop %v1011
        %v1016 = vrcp.pop %v1014
        %v1017 = vmul.f32 %v1011, %v1015
        %v1018 = vmul.f32 %v1014, %v1016
        %v1019 = vsub.f32 2.0, %v1017
        %v1020 = vsub.f32 2.0, %v1018
        %v1021 = vmul.f32 %v1015, %v1019
        %v1022 = vmul.f32 %v1016, %v1020
        %v1023 = vmul.f32 %v1006, %v1021
        %v1024 = vmul.f32 %v1008, %v1022
        %1025 = vrot.lane.b32.xlu0 %v796, 48
        %v1026 = vpop.permute.xlu0 %1025
        %v1029 = vsel %vm858, %v1023, 0
        %1031 = vmatpush.msra.mxu0 0.0
        %1032 = vmatpush.msra.mxu0 0.0
        %1033 = vmatpush.msra.mxu0 0.0
        %1034 = vmatpush.msra.mxu0 0.0
        %1035 = vmatpush.msra.mxu0 0.0
        %1036 = vmatpush.msra.mxu0 0.0
        %1037 = vmatpush.msra.mxu0 0.0
        %1038 = vmatpush.msra.mxu0 0.0
        %1039 = vmatpush.msra.mxu0 0.0
        %1040 = vmatpush.msra.mxu0 0.0
        %1041 = vmatpush.msra.mxu0 0.0
        %1042 = vmatpush.msra.mxu0 0.0
        %1043 = vmatpush.msra.mxu0 0.0
        %1044 = vmatpush.msra.mxu0 0.0
        %1045 = vmatpush.msra.mxu0 0.0
        %1046 = vmatpush.msra.mxu0 %v1026
        %1047 = vmatmul.f32.gmra.mxu0 %v1029
        %v1048 = vpop.f32.mrf.mxu0
        %v1049 = vadd.f32 0.0, %v1048
        %1050 = vdwg.mxu0
        %1051 = vrot.lane.b32.xlu0 %v799, 48
        %v1052 = vpop.permute.xlu0 %1051
        %v1055 = vsel %vm858, %v1024, 0
        %1057 = vmatpush.msra.mxu0 0.0
        %1058 = vmatpush.msra.mxu0 0.0
        %1059 = vmatpush.msra.mxu0 0.0
        %1060 = vmatpush.msra.mxu0 0.0
        %1061 = vmatpush.msra.mxu0 0.0
        %1062 = vmatpush.msra.mxu0 0.0
        %1063 = vmatpush.msra.mxu0 0.0
        %1064 = vmatpush.msra.mxu0 0.0
        %1065 = vmatpush.msra.mxu0 0.0
        %1066 = vmatpush.msra.mxu0 0.0
        %1067 = vmatpush.msra.mxu0 0.0
        %1068 = vmatpush.msra.mxu0 0.0
        %1069 = vmatpush.msra.mxu0 0.0
        %1070 = vmatpush.msra.mxu0 0.0
        %1071 = vmatpush.msra.mxu0 0.0
        %1072 = vmatpush.msra.mxu0 %v1052
        %1073 = vmatmul.f32.gmra.mxu0 %v1055
        %v1074 = vpop.f32.mrf.mxu0
        %v1075 = vadd.f32 0.0, %v1074
        %1076 = vdwg.mxu0
        %1079 = vrot.lane.b32.xlu0 %v1049, 16
        %v1080 = vpop.permute.xlu0 %1079
        %1081 = vrot.lane.b32.xlu0 %v1075, 16
        %v1082 = vpop.permute.xlu0 %1081
        %v1085 = vsel %vm804, %v911, %v1080
        %v1086 = vsel %vm804, %v937, %v1082
        %v1087 = vld [vmem:[%s658] sm:$0xff]
        %v1088 = vld [vmem:[%s658 + $0x8] sm:$0xff]
        %v1089 = vld [vmem:[%s658 + $0x10] sm:$0xff]
        %v1090 = vld [vmem:[%s658 + $0x18] sm:$0xff]
        %v1091 = vld [vmem:[%s661] sm:$0x1]
        %v1093 = vperm.slane %v1091, 0
        %v1096 = vsel %vm706, %v1085, 0
        %v1099 = vsel %vm706, %v1086, 0
        %1101 = vmatpush.msra.mxu0 0.0
        %1102 = vmatpush.msra.mxu0 0.0
        %1103 = vmatpush.msra.mxu0 0.0
        %1104 = vmatpush.msra.mxu0 0.0
        %1105 = vmatpush.msra.mxu0 0.0
        %1106 = vmatpush.msra.mxu0 0.0
        %1107 = vmatpush.msra.mxu0 0.0
        %1108 = vmatpush.msra.mxu0 0.0
        %1109 = vmatpush.msra.mxu0 0.0
        %1110 = vmatpush.msra.mxu0 0.0
        %1111 = vmatpush.msra.mxu0 0.0
        %1112 = vmatpush.msra.mxu0 0.0
        %1113 = vmatpush.msra.mxu0 %v1090
        %1114 = vmatpush.msra.mxu0 %v1089
        %1115 = vmatpush.msra.mxu0 %v1088
        %1116 = vmatpush.msra.mxu0 %v1087
        %1117 = vmatmul.f32.gmra.mxu0 %v1096
        %v1118 = vpop.f32.mrf.mxu0
        %v1119 = vadd.f32 %v1093, %v1118
        %1120 = vmatmul.f32.gmra.mxu0 %v1099
        %v1121 = vpop.f32.mrf.mxu0
        %v1122 = vadd.f32 %v1093, %v1121
        %1123 = vdwg.mxu0
        %v1124 = vadd.f32 %v702, %v1119
        %v1125 = vadd.f32 %v703, %v1122
        %v1126 = vld [vmem:[%s664] sm:$0x1]
        %v1127 = vld [vmem:[%s667] sm:$0x1]
        %v1128 = vsel %vm706, %v1124, 0.0
        %1129 = vadd.xlane.f32.xlu0 %v1128
        %v1130 = vpop.xlane.xlu0 %1129
        %v1131 = vsel %vm706, %v1125, 0.0
        %1132 = vadd.xlane.f32.xlu0 %v1131
        %v1133 = vpop.xlane.xlu0 %1132
        %v1134 = vmul.f32 %v1130, %v719
        %v1135 = vmul.f32 %v1133, %v719
        %v1136 = vsub.f32 %v1124, %v1134
        %v1137 = vsub.f32 %v1125, %v1135
        %v1138 = vmul.f32 %v1136, %v1136
        %v1139 = vmul.f32 %v1137, %v1137
        %v1140 = vsel %vm706, %v1138, 0.0
        %1141 = vadd.xlane.f32.xlu0 %v1140
        %v1142 = vpop.xlane.xlu0 %1141
        %v1143 = vsel %vm706, %v1139, 0.0
        %1144 = vadd.xlane.f32.xlu0 %v1143
        %v1145 = vpop.xlane.xlu0 %1144
        %v1146 = vmul.f32 %v1142, %v719
        %v1147 = vmul.f32 %v1145, %v719
        %v1148 = vadd.f32 %v1146, 1e-05
        %v1149 = vadd.f32 %v1147, 1e-05
        %v1150 = vrsqrt.pop %v1148
        %v1151 = vmul.f32 %v1150, %v1148
        %v1152 = vmul.f32 %v1151, %v1150
        %v1153 = vmul.f32 0.5, %v1152
        %v1154 = vsub.f32 1.5, %v1153
        %v1155 = vmul.f32 %v1150, %v1154
        %vm1156 = vweird.f32 %v1148
        %vm1157 = vweird.f32 %v1150
        %vm1158 = vmor %vm1156, %vm1157
        %v1159 = vsel %vm1158, %v1150, %v1155
        %v1160 = vrsqrt.pop %v1149
        %v1161 = vmul.f32 %v1160, %v1149
        %v1162 = vmul.f32 %v1161, %v1160
        %v1163 = vmul.f32 0.5, %v1162
        %v1164 = vsub.f32 1.5, %v1163
        %v1165 = vmul.f32 %v1160, %v1164
        %vm1166 = vweird.f32 %v1149
        %vm1167 = vweird.f32 %v1160
        %vm1168 = vmor %vm1166, %vm1167
        %v1169 = vsel %vm1168, %v1160, %v1165
        %v1170 = vmul.f32 %v1136, %v1159
        %v1171 = vmul.f32 %v1137, %v1169
        %v1173 = vperm.slane %v1126, 0
        %v1175 = vmul.f32 %v1170, %v1173
        %v1176 = vmul.f32 %v1171, %v1173
        %v1178 = vperm.slane %v1127, 0
        %v1180 = vadd.f32 %v1175, %v1178
        %v1181 = vadd.f32 %v1176, %v1178
        %v1182 = vld [vmem:[%s672] sm:$0xff]
        %v1183 = vld [vmem:[%s672 + $0x8] sm:$0xff]
        %v1184 = vld [vmem:[%s672 + $0x10] sm:$0xff]
        %v1185 = vld [vmem:[%s672 + $0x18] sm:$0xff]
        %v1186 = vld [vmem:[%s675] sm:$0x1]
        %v1188 = vperm.slane %v1186, 0
        %v1191 = vsel %vm706, %v1180, 0
        %v1194 = vsel %vm706, %v1181, 0
        %1196 = vmatpush.msra.mxu0 0.0
        %1197 = vmatpush.msra.mxu0 0.0
        %1198 = vmatpush.msra.mxu0 0.0
        %1199 = vmatpush.msra.mxu0 0.0
        %1200 = vmatpush.msra.mxu0 0.0
        %1201 = vmatpush.msra.mxu0 0.0
        %1202 = vmatpush.msra.mxu0 0.0
        %1203 = vmatpush.msra.mxu0 0.0
        %1204 = vmatpush.msra.mxu0 0.0
        %1205 = vmatpush.msra.mxu0 0.0
        %1206 = vmatpush.msra.mxu0 0.0
        %1207 = vmatpush.msra.mxu0 0.0
        %1208 = vmatpush.msra.mxu0 %v1185
        %1209 = vmatpush.msra.mxu0 %v1184
        %1210 = vmatpush.msra.mxu0 %v1183
        %1211 = vmatpush.msra.mxu0 %v1182
        %1212 = vmatmul.f32.gmra.mxu0 %v1191
        %v1213 = vpop.f32.mrf.mxu0
        %v1214 = vadd.f32 %v1188, %v1213
        %1215 = vmatmul.f32.gmra.mxu0 %v1194
        %v1216 = vpop.f32.mrf.mxu0
        %v1217 = vadd.f32 %v1188, %v1216
        %1218 = vdwg.mxu0
        %v1219 = vld [vmem:[%s680] sm:$0xff]
        %v1220 = vld [vmem:[%s680 + $0x8] sm:$0xff]
        %v1221 = vld [vmem:[%s680 + $0x10] sm:$0xff]
        %v1222 = vld [vmem:[%s680 + $0x18] sm:$0xff]
        %v1223 = vld [vmem:[%s683] sm:$0x1]
        %v1225 = vperm.slane %v1223, 0
        %1227 = vmatpush.msra.mxu0 0.0
        %1228 = vmatpush.msra.mxu0 0.0
        %1229 = vmatpush.msra.mxu0 0.0
        %1230 = vmatpush.msra.mxu0 0.0
        %1231 = vmatpush.msra.mxu0 0.0
        %1232 = vmatpush.msra.mxu0 0.0
        %1233 = vmatpush.msra.mxu0 0.0
        %1234 = vmatpush.msra.mxu0 0.0
        %1235 = vmatpush.msra.mxu0 0.0
        %1236 = vmatpush.msra.mxu0 0.0
        %1237 = vmatpush.msra.mxu0 0.0
        %1238 = vmatpush.msra.mxu0 0.0
        %1239 = vmatpush.msra.mxu0 %v1222
        %1240 = vmatpush.msra.mxu0 %v1221
        %1241 = vmatpush.msra.mxu0 %v1220
        %1242 = vmatpush.msra.mxu0 %v1219
        %1243 = vmatmul.f32.gmra.mxu0 %v1191
        %v1244 = vpop.f32.mrf.mxu0
        %v1245 = vadd.f32 %v1225, %v1244
        %1246 = vmatmul.f32.gmra.mxu0 %v1194
        %v1247 = vpop.f32.mrf.mxu0
        %v1248 = vadd.f32 %v1225, %v1247
        %1249 = vdwg.mxu0
        %v1250 = vmul.f32 %v1245, 0.5
        %v1251 = vmul.f32 %v1248, 0.5
        %v1252 = vmul.f32 %v1245, 0.70710677
        %v1253 = vmul.f32 %v1248, 0.70710677
        %v1254 = vmul.f32 %v1252, %v1252
        %v1255 = vmin.f32 16.0, %v1254
        %v1256 = vmul.f32 %v1255, 2.1237322e-06
        %v1257 = vadd.f32 %v1256, 0.00028619796
        %v1258 = vmul.f32 %v1255, %v1257
        %v1259 = vadd.f32 %v1258, 0.0036580483
        %v1260 = vmul.f32 %v1255, %v1259
        %v1261 = vadd.f32 %v1260, 0.05243302
        %v1262 = vmul.f32 %v1255, %v1261
        %v1263 = vadd.f32 %v1262, 0.18741608
        %v1264 = vmul.f32 %v1255, %v1263
        %v1265 = vadd.f32 %v1264, 1.1283791
        %v1266 = vmul.f32 %v1252, %v1265
        %v1267 = vmul.f32 %v1255, 3.8918573e-05
        %v1268 = vadd.f32 %v1267, 0.001143296
        %v1269 = vmul.f32 %v1255, %v1268
        %v1270 = vadd.f32 %v1269, 0.014752088
        %v1271 = vmul.f32 %v1255, %v1270
        %v1272 = vadd.f32 %v1271, 0.112945676
        %v1273 = vmul.f32 %v1255, %v1272
        %v1274 = vadd.f32 %v1273, 0.4994258
        %v1275 = vmul.f32 %v1255, %v1274
        %v1276 = vadd.f32 %v1275, 1.0
        %v1277 = vrcp.pop %v1276
        %v1278 = vmul.f32 %v1276, %v1277
        %v1279 = vsub.f32 1.0, %v1278
        %v1280 = vmul.f32 %v1277, %v1279
        %v1281 = vadd.f32 %v1277, %v1280
        %vm1282 = vweird.f32 %v1276
        %vm1283 = vweird.f32 %v1277
        %vm1284 = vmor %vm1282, %vm1283
        %v1285 = vsel %vm1284, %v1277, %v1281
        %v1286 = vand.u32 2147483647, %v1276
        %vm1287 = vcmp.eq.f32.partialorder %v1286, 8.507059e+37
        %v1288 = vand.u32 %v1276, 2147483648
        %v1289 = vor.u32 1.1754944e-38, %v1288
        %v1290 = vsel %vm1287, %v1289, %v1285
        %v1291 = vmul.f32 %v1266, %v1290
        %v1292 = vmin.f32 %v1291, 1.0
        %v1293 = vmax.f32 %v1292, -1.0
        %v1294 = vmul.f32 %v1253, %v1253
        %v1295 = vmin.f32 16.0, %v1294
        %v1296 = vmul.f32 %v1295, 2.1237322e-06
        %v1297 = vadd.f32 %v1296, 0.00028619796
        %v1298 = vmul.f32 %v1295, %v1297
        %v1299 = vadd.f32 %v1298, 0.0036580483
        %v1300 = vmul.f32 %v1295, %v1299
        %v1301 = vadd.f32 %v1300, 0.05243302
        %v1302 = vmul.f32 %v1295, %v1301
        %v1303 = vadd.f32 %v1302, 0.18741608
        %v1304 = vmul.f32 %v1295, %v1303
        %v1305 = vadd.f32 %v1304, 1.1283791
        %v1306 = vmul.f32 %v1253, %v1305
        %v1307 = vmul.f32 %v1295, 3.8918573e-05
        %v1308 = vadd.f32 %v1307, 0.001143296
        %v1309 = vmul.f32 %v1295, %v1308
        %v1310 = vadd.f32 %v1309, 0.014752088
        %v1311 = vmul.f32 %v1295, %v1310
        %v1312 = vadd.f32 %v1311, 0.112945676
        %v1313 = vmul.f32 %v1295, %v1312
        %v1314 = vadd.f32 %v1313, 0.4994258
        %v1315 = vmul.f32 %v1295, %v1314
        %v1316 = vadd.f32 %v1315, 1.0
        %v1317 = vrcp.pop %v1316
        %v1318 = vmul.f32 %v1316, %v1317
        %v1319 = vsub.f32 1.0, %v1318
        %v1320 = vmul.f32 %v1317, %v1319
        %v1321 = vadd.f32 %v1317, %v1320
        %vm1322 = vweird.f32 %v1316
        %vm1323 = vweird.f32 %v1317
        %vm1324 = vmor %vm1322, %vm1323
        %v1325 = vsel %vm1324, %v1317, %v1321
        %v1326 = vand.u32 2147483647, %v1316
        %vm1327 = vcmp.eq.f32.partialorder %v1326, 8.507059e+37
        %v1328 = vand.u32 %v1316, 2147483648
        %v1329 = vor.u32 1.1754944e-38, %v1328
        %v1330 = vsel %vm1327, %v1329, %v1325
        %v1331 = vmul.f32 %v1306, %v1330
        %v1332 = vmin.f32 %v1331, 1.0
        %v1333 = vmax.f32 %v1332, -1.0
        %v1334 = vadd.f32 %v1293, 1.0
        %v1335 = vadd.f32 %v1333, 1.0
        %v1336 = vmul.f32 %v1250, %v1334
        %v1337 = vmul.f32 %v1251, %v1335
        %v1338 = vmul.f32 %v1214, %v1336
        %v1339 = vmul.f32 %v1217, %v1337
        %v1340 = vld [vmem:[%s688] sm:$0xff]
        %v1341 = vld [vmem:[%s688 + $0x8] sm:$0xff]
        %v1342 = vld [vmem:[%s688 + $0x10] sm:$0xff]
        %v1343 = vld [vmem:[%s688 + $0x18] sm:$0xff]
        %v1344 = vld [vmem:[%s688 + $0x20] sm:$0xff]
        %v1345 = vld [vmem:[%s688 + $0x28] sm:$0xff]
        %v1346 = vld [vmem:[%s688 + $0x30] sm:$0xff]
        %v1347 = vld [vmem:[%s688 + $0x38] sm:$0xff]
        %v1348 = vld [vmem:[%s688 + $0x40] sm:$0xff]
        %v1349 = vld [vmem:[%s688 + $0x48] sm:$0xff]
        %v1350 = vld [vmem:[%s688 + $0x50] sm:$0xff]
        %v1351 = vld [vmem:[%s688 + $0x58] sm:$0xff]
        %v1352 = vld [vmem:[%s688 + $0x60] sm:$0xff]
        %v1353 = vld [vmem:[%s688 + $0x68] sm:$0xff]
        %v1354 = vld [vmem:[%s688 + $0x70] sm:$0xff]
        %v1355 = vld [vmem:[%s688 + $0x78] sm:$0xff]
        %v1356 = vld [vmem:[%s691] sm:$0x1]
        %v1358 = vperm.slane %v1356, 0
        %1360 = vmatpush.msra.mxu0 %v1355
        %1361 = vmatpush.msra.mxu0 %v1354
        %1362 = vmatpush.msra.mxu0 %v1353
        %1363 = vmatpush.msra.mxu0 %v1352
        %1364 = vmatpush.msra.mxu0 %v1351
        %1365 = vmatpush.msra.mxu0 %v1350
        %1366 = vmatpush.msra.mxu0 %v1349
        %1367 = vmatpush.msra.mxu0 %v1348
        %1368 = vmatpush.msra.mxu0 %v1347
        %1369 = vmatpush.msra.mxu0 %v1346
        %1370 = vmatpush.msra.mxu0 %v1345
        %1371 = vmatpush.msra.mxu0 %v1344
        %1372 = vmatpush.msra.mxu0 %v1343
        %1373 = vmatpush.msra.mxu0 %v1342
        %1374 = vmatpush.msra.mxu0 %v1341
        %1375 = vmatpush.msra.mxu0 %v1340
        %1376 = vmatmul.f32.gmra.mxu0 %v1338
        %v1377 = vpop.f32.mrf.mxu0
        %v1378 = vadd.f32 %v1358, %v1377
        %1379 = vmatmul.f32.gmra.mxu0 %v1339
        %v1380 = vpop.f32.mrf.mxu0
        %v1381 = vadd.f32 %v1358, %v1380
        %1382 = vdwg.mxu0
        %v1383 = vadd.f32 %v1124, %v1378
        %v1384 = vadd.f32 %v1125, %v1381
        %1385 = vst.msk [vmem:[#allocation2] sm:$0xff] %vm706, %v1383
        %1386 = vst.msk [vmem:[#allocation2 + $0x8] sm:$0xff] %vm706, %v1384
        %p1387 = scmp.eq.s32.totalorder %s33, 1
        // Predicated region
        $region81: #{tpu_custom_call.1} parent=75 // pred_check
          %p1388 = pneg %p1387
        $region82: #{tpu_custom_call.1} parent=75 // pred_check_branch
          %1390 = sbr.rel (%p1388) target = $region84
        $region83: #{tpu_custom_call.1} parent=75 // pred_region
          %1391 = vst.msk [vmem:[%s636] sm:$0xff] %vm706, %v1383
          %1392 = vst.msk [vmem:[%s636 + $0x8] sm:$0xff] %vm706, %v1384
        $region84: #{tpu_custom_call.1} parent=75 // pred_fallthru
          _
        %s1393 = sand.u32 %s412, 1
        %s1394 = scalar_lea.sflag [#allocation4], %s1393
        %s1395 = sand.u32 %s412, 1
        %s1396 = smul.addr %s1395, 16
        %s1397 = scalar_lea.vmem [#allocation3], %s1396
        // Predicated region
        $region85: #{tpu_custom_call.1} parent=75 // pred_check
          %p1398 = pneg %p422
        $region86: #{tpu_custom_call.1} parent=75 // pred_check_branch
          %1400 = sbr.rel (%p1398) target = $region88
        $region87: #{tpu_custom_call.1} parent=75 // pred_region
          %s1401 = smul.u32 2, %s32
          %1403 = vsyncadd %s1394, 0
          %s1404 = smul.addr %s1401, 8
          %s1405 = scalar_lea.hbm %s14, %s1404
          %s1406 = sshll.u32 %s1397, 4
          %s1407 = int_to_ptr.vmem [resolvable:$true] %s1406
          %s1408 = sshll.u32 %s1405, 4
          %s1409 = int_to_ptr.hbm [resolvable:$true] %s1408
          %1414 = dma.vmem_to_hbm [thread:$0]  %s1407, 256, %s1409, %s1394, 128, 128, 8
        $region88: #{tpu_custom_call.1} parent=75 // pred_fallthru
          _
      $region76: #{tpu_custom_call.1} parent=5 // pred_fallthru
        _
      %p1415 = scmp.le.s32.totalorder 2, %s23
      // Predicated region
      $region89: #{tpu_custom_call.1} parent=5 // pred_check
        %p1416 = pneg %p1415
      $region90: #{tpu_custom_call.1} parent=5 // pred_check_branch
        %1418 = sbr.rel (%p1416) target = $region92
      $region91: #{tpu_custom_call.1} parent=5 // pred_region
        %s1419 = ssub.s32 %s23, 2
        // Predicated region
        $region93: #{tpu_custom_call.1} parent=91 // pred_check
          %p1420 = pneg %p428
        $region94: #{tpu_custom_call.1} parent=91 // pred_check_branch
          %1422 = sbr.rel (%p1420) target = $region96
        $region95: #{tpu_custom_call.1} parent=91 // pred_region
          %s1423 = sand.u32 %s413, 1
          %s1424 = scalar_lea.sflag [#allocation4], %s1423
          %s1425 = sand.u32 %s413, 1
          %s1426 = smul.addr %s1425, 16
          %s1427 = scalar_lea.vmem [#allocation3], %s1426
          %1429 = dma.done %s1424, 256
        $region96: #{tpu_custom_call.1} parent=91 // pred_fallthru
          _
      $region92: #{tpu_custom_call.1} parent=5 // pred_fallthru
        _
    $region6: #{tpu_custom_call.1} parent=1 // loop_footer
      %s27 = sadd.s32 1, %s23
    $region7: #{tpu_custom_call.1} parent=1 // loop_footer_branch
      %22 = sbr.rel target = $region3
    $region8: #{tpu_custom_call.1} parent=1 // loop_exit
      _
    %1430 = vsyncpa [#allocation4], 1
    %s1431 = scalar_lea.sflag [#allocation4], 1
    %1432 = vsyncpa %s1431, 1

</llo_original>
